<compile_context>
chip_gen: v7x
topology: tpu7x:2x2x1
jax: 0.10.0
libtpu: 0.0.40
codegen_flags: <defaults>
</compile_context>

<pallas_src>
import jax
import jax.numpy as jnp
from jax.experimental import pallas as pl
from jax.experimental.pallas import tpu as pltpu

LN_EPS = 1e-5

# Row indices inside the packed (8, L) per-feature parameter block.
_B1, _G1, _BT1, _B2, _G2, _BT2, _W3 = range(7)


def _layernorm(x, gamma, beta):
    # Both cross-lane (XLU) reductions are issued back-to-back: var = E[x^2] - mean^2.
    # (Avoids the XLU reduce -> VPU center/square -> XLU reduce round trip.)
    inv_n = 1.0 / x.shape[-1]
    s1 = jnp.sum(x, axis=-1, keepdims=True)
    s2 = jnp.sum(x * x, axis=-1, keepdims=True)
    mean = s1 * inv_n
    var = jnp.maximum(s2 * inv_n - mean * mean, 0.0)   # clamp guards f32 cancellation
    inv = jax.lax.rsqrt(var + LN_EPS)
    return (x - mean) * inv * gamma + beta


def _mish(x):
    # mish(x) = x * tanh(softplus(x)) = x * u / (u + 2),  u = e^x (e^x + 2)
    # -> one exp (EUP) + one approx reciprocal (EUP) instead of exp + log1p + tanh + exact divide.
    # Clamp at 20: for x > 20, u/(u+2) == 1 in f32, so the clamp is exact and no inf is produced.
    t = jnp.exp(jnp.minimum(x, 20.0))
    u = t * (t + 2.0)
    return x * u * pl.reciprocal(u + 2.0, approx=True)


def critic_kernel(xs_ref, xa_ref, w1s_ref, w1a_ref, w2_ref, vec_ref, b3_ref, o_ref):
    # bf16 MXU operands, f32 accumulation / LayerNorm / Mish.
    xs = xs_ref[...].astype(jnp.bfloat16)            # (TB, L)
    xa = xa_ref[...].astype(jnp.bfloat16)            # (TB, A)

    b1  = vec_ref[_B1:_B1 + 1, :]                    # (1, L) f32 rows of the packed block
    g1  = vec_ref[_G1:_G1 + 1, :]
    bt1 = vec_ref[_BT1:_BT1 + 1, :]
    b2  = vec_ref[_B2:_B2 + 1, :]
    g2  = vec_ref[_G2:_G2 + 1, :]
    bt2 = vec_ref[_BT2:_BT2 + 1, :]
    w3  = vec_ref[_W3:_W3 + 1, :]

    # --- NormedLinear 1: split Linear (replaces concat) -> (dropout: identity) -> LayerNorm -> Mish
    h = (jnp.dot(xs, w1s_ref[...], preferred_element_type=jnp.float32)
         + jnp.dot(xa, w1a_ref[...], preferred_element_type=jnp.float32)
         + b1)
    h = _mish(_layernorm(h, g1, bt1))                # (TB, L) f32

    # --- NormedLinear 2: Linear -> LayerNorm -> Mish ---
    h = jnp.dot(h.astype(jnp.bfloat16), w2_ref[...],
                preferred_element_type=jnp.float32) + b2
    h = _mish(_layernorm(h, g2, bt2))                # (TB, L) f32

    # --- Final Linear (L -> 1), lane-dense: (1, L) contracted with (TB, L) on L -> (1, TB).
    # Contraction is on the lane dim of both operands (A @ B^T form), so no explicit transpose of h
    # is needed and the batch lands on the output lane axis (unmasked stores).
    q = jax.lax.dot_general(w3, h,
                            dimension_numbers=(((1,), (1,)), ((), ())),
                            preferred_element_type=jnp.float32)   # (1, TB)
    o_ref[...] = (q + b3_ref[0]).astype(o_ref.dtype)


def critic_net_forward(latent_state, latent_action, params, *, batch_tile=None):
    """latent_state: (B, L), latent_action: (B, A) -> q: (B, 1)."""
    B, L = latent_state.shape
    _, A = latent_action.shape

    if batch_tile is None:
        if B % 128 != 0:
            batch_tile = B
        else:
            # Target >= 4 grid steps (>= 2 pipelined steps per TensorCore on v7x) while keeping the
            # tile a lane-aligned multiple of 128 and as large as possible to amortize the per-step
            # overhead and MXU weight pushes. VMEM is far under the limit at any of these sizes.
            tb = max(128, ((B // 4) // 128) * 128)
            while B % tb:
                tb -= 128
            batch_tile = tb
    TB = batch_tile
    assert B % TB == 0, "batch must be divisible by batch_tile"
    assert TB == B or TB % 128 == 0, "batch_tile must be a multiple of 128 or equal the batch size"
    nb = B // TB

    rep = lambda i: (0, 0)   # weights / packed vectors: whole-array block, fetched once per core

    grid_spec = pltpu.PrefetchScalarGridSpec(
        num_scalar_prefetch=0,
        grid=(nb,),
        in_specs=[
            pl.BlockSpec((TB, L), lambda i: (i, 0)),   # latent_state tile over batch
            pl.BlockSpec((TB, A), lambda i: (i, 0)),   # latent_action tile over batch
            pl.BlockSpec((L, L), rep),                 # w1_s (bf16)
            pl.BlockSpec((A, L), rep),                 # w1_a (bf16)
            pl.BlockSpec((L, L), rep),                 # w2   (bf16)
            pl.BlockSpec((8, L), rep),                 # packed [b1,g1,bt1,b2,g2,bt2,w3,pad] (f32)
            pl.BlockSpec(memory_space=pltpu.MemorySpace.SMEM),   # b3 scalar, (1,) in SMEM
        ],
        out_specs=pl.BlockSpec((1, TB), lambda i: (0, i)),       # lane-dense output row
    )

    q_rows = pl.pallas_call(
        critic_kernel,
        out_shape=jax.ShapeDtypeStruct((1, B), jnp.float32),
        grid_spec=grid_spec,
        compiler_params=pltpu.CompilerParams(dimension_semantics=("parallel",)),
        # Tiles are tiny (<1 MiB double-buffered); no vmem_limit_bytes needed on v5e/v6e/v7x.
        # If TB is pushed into the thousands, set vmem_limit_bytes explicitly (v5e scoped default
        # is 16 MiB).
    )(latent_state, latent_action,
      params["w1_s"], params["w1_a"], params["w2"], params["vecs"], params["b3"])

    return q_rows.reshape(B, 1)


def init_params(key, latent_size, action_size):
    """Deterministic synthetic parameters (PyTorch-Linear-like uniform init)."""
    F_in = latent_size + action_size
    L = latent_size
    ks = jax.random.split(key, 6)

    def lin(kw, kb, fan_in, fan_out):
        bound = 1.0 / jnp.sqrt(fan_in)
        w = jax.random.uniform(kw, (fan_in, fan_out), jnp.float32, -bound, bound)
        b = jax.random.uniform(kb, (1, fan_out), jnp.float32, -bound, bound)
        return w, b

    w1, b1 = lin(ks[0], ks[1], F_in, L)
    w2, b2 = lin(ks[2], ks[3], L, L)
    w3, b3 = lin(ks[4], ks[5], L, 1)
    ones = jnp.ones((1, L), jnp.float32)
    zeros = jnp.zeros((1, L), jnp.float32)

    # Seven (1, L) per-feature vectors packed into one aligned (8, L) block -> a single DMA.
    vecs = jnp.concatenate(
        [b1, ones, zeros,                 # NormedLinear 1: bias, ln gamma, ln beta
         b2, ones, zeros,                 # NormedLinear 2: bias, ln gamma, ln beta
         jnp.transpose(w3),               # final-layer weight as a (1, L) row
         zeros],                          # padding row
        axis=0)

    return dict(
        w1_s=w1[:L].astype(jnp.bfloat16),   # split of the (L+A, L) first-layer weight
        w1_a=w1[L:].astype(jnp.bfloat16),
        w2=w2.astype(jnp.bfloat16),
        vecs=vecs,                          # (8, L) f32
        b3=b3.reshape(1),                   # scalar, lives in SMEM
    )


def _reference(latent_state, latent_action, p):
    # Mirrors the PyTorch module (concat -> NormedLinear -> NormedLinear -> Linear) in full f32
    # precision, using the same (bf16-stored) weights upcast to f32.
    x = jnp.concatenate([latent_state, latent_action], axis=-1).astype(jnp.float32)
    w1 = jnp.concatenate([p["w1_s"], p["w1_a"]], axis=0).astype(jnp.float32)
    w2 = p["w2"].astype(jnp.float32)
    v = p["vecs"]
    b1, g1, bt1 = v[_B1:_B1 + 1], v[_G1:_G1 + 1], v[_BT1:_BT1 + 1]
    b2, g2, bt2 = v[_B2:_B2 + 1], v[_G2:_G2 + 1], v[_BT2:_BT2 + 1]
    w3 = v[_W3:_W3 + 1]
    hi = jax.lax.Precision.HIGHEST

    def ln(x, g, b):
        m = jnp.mean(x, -1, keepdims=True)
        var = jnp.mean((x - m) ** 2, -1, keepdims=True)
        return (x - m) / jnp.sqrt(var + LN_EPS) * g + b

    def mish(x):
        return x * jnp.tanh(jax.nn.softplus(x))

    h = mish(ln(jnp.dot(x, w1, precision=hi) + b1, g1, bt1))
    h = mish(ln(jnp.dot(h, w2, precision=hi) + b2, g2, bt2))
    return jnp.dot(h, jnp.transpose(w3), precision=hi) + p["b3"]


if __name__ == "__main__":
    latent_size = 128
    action_size = 16
    batch = 512          # -> TB=128, 4 grid steps: 2 pipelined steps per TensorCore on v7x

    key = jax.random.PRNGKey(0)
    k_state, k_action, k_params = jax.random.split(key, 3)

    latent_state = jax.random.normal(k_state, (batch, latent_size), jnp.float32)
    latent_action = jax.random.normal(k_action, (batch, action_size), jnp.float32)
    params = init_params(k_params, latent_size, action_size)

    q = critic_net_forward(latent_state, latent_action, params)
    jax.block_until_ready(q)

    q_ref = _reference(latent_state, latent_action, params)
    assert q.shape == (batch, 1)
    # Tolerance loosened slightly vs the all-f32 version: bf16 matmul operands contribute ~0.5%
    # relative error, mostly washed out by the following LayerNorms.
    assert jnp.allclose(q, q_ref, atol=2e-2, rtol=2e-2), (q[:4], q_ref[:4])

    print("KERNEL_OK")
</pallas_src>

<mosaic_0001>
module attributes {stable_mosaic.version = 11 : i64} {
  func.func @critic_kernel(%arg0: i32, %arg1: memref<128x128xf32, #tpu.memory_space<vmem>>, %arg2: memref<128x16xf32, #tpu.memory_space<vmem>>, %arg3: memref<128x128xbf16, #tpu.memory_space<vmem>>, %arg4: memref<16x128xbf16, #tpu.memory_space<vmem>>, %arg5: memref<128x128xbf16, #tpu.memory_space<vmem>>, %arg6: memref<8x128xf32, #tpu.memory_space<vmem>>, %arg7: memref<1xf32, #tpu.memory_space<smem>>, %arg8: memref<1x128xf32, #tpu.memory_space<vmem>>) attributes {dimension_semantics = [#tpu.dimension_semantics<parallel>], iteration_bounds = array<i64: 4>, scalar_prefetch = 0 : i64, scratch_operands = 0 : i64, tpu.core_type = #tpu.core_type<tc>, window_params = [{transform_indices = @transform_0, window_bounds = array<i64: 128, 128>}, {transform_indices = @transform_1, window_bounds = array<i64: 128, 16>}, {pipeline_mode = #tpu.pipeline_mode<synchronous>, transform_indices = @transform_2, window_bounds = array<i64: 128, 128>}, {pipeline_mode = #tpu.pipeline_mode<synchronous>, transform_indices = @transform_3, window_bounds = array<i64: 16, 128>}, {pipeline_mode = #tpu.pipeline_mode<synchronous>, transform_indices = @transform_4, window_bounds = array<i64: 128, 128>}, {pipeline_mode = #tpu.pipeline_mode<synchronous>, transform_indices = @transform_5, window_bounds = array<i64: 8, 128>}, {transform_indices = @transform_6, window_bounds = array<i64: 1>}, {transform_indices = @transform_7, window_bounds = array<i64: 1, 128>}]} {
    %c0 = arith.constant 0 : index
    %c0_0 = arith.constant 0 : index
    %0 = vector.load %arg1[%c0, %c0_0] : memref<128x128xf32, #tpu.memory_space<vmem>>, vector<128x128xf32>
    %1 = arith.truncf %0 : vector<128x128xf32> to vector<128x128xbf16>
    %c0_1 = arith.constant 0 : index
    %c0_2 = arith.constant 0 : index
    %2 = vector.load %arg2[%c0_1, %c0_2] : memref<128x16xf32, #tpu.memory_space<vmem>>, vector<128x16xf32>
    %3 = arith.truncf %2 : vector<128x16xf32> to vector<128x16xbf16>
    %c0_3 = arith.constant 0 : index
    %c0_4 = arith.constant 0 : index
    %4 = vector.load %arg6[%c0_3, %c0_4] : memref<8x128xf32, #tpu.memory_space<vmem>>, vector<1x128xf32>
    %c1 = arith.constant 1 : index
    %c0_5 = arith.constant 0 : index
    %5 = vector.load %arg6[%c1, %c0_5] : memref<8x128xf32, #tpu.memory_space<vmem>>, vector<1x128xf32>
    %c2 = arith.constant 2 : index
    %c0_6 = arith.constant 0 : index
    %6 = vector.load %arg6[%c2, %c0_6] : memref<8x128xf32, #tpu.memory_space<vmem>>, vector<1x128xf32>
    %c3 = arith.constant 3 : index
    %c0_7 = arith.constant 0 : index
    %7 = vector.load %arg6[%c3, %c0_7] : memref<8x128xf32, #tpu.memory_space<vmem>>, vector<1x128xf32>
    %c4 = arith.constant 4 : index
    %c0_8 = arith.constant 0 : index
    %8 = vector.load %arg6[%c4, %c0_8] : memref<8x128xf32, #tpu.memory_space<vmem>>, vector<1x128xf32>
    %c5 = arith.constant 5 : index
    %c0_9 = arith.constant 0 : index
    %9 = vector.load %arg6[%c5, %c0_9] : memref<8x128xf32, #tpu.memory_space<vmem>>, vector<1x128xf32>
    %c6 = arith.constant 6 : index
    %c0_10 = arith.constant 0 : index
    %10 = vector.load %arg6[%c6, %c0_10] : memref<8x128xf32, #tpu.memory_space<vmem>>, vector<1x128xf32>
    %c0_11 = arith.constant 0 : index
    %c0_12 = arith.constant 0 : index
    %11 = vector.load %arg3[%c0_11, %c0_12] : memref<128x128xbf16, #tpu.memory_space<vmem>>, vector<128x128xbf16>
    %cst = arith.constant dense<0.000000e+00> : vector<128x128xf32>
    %12 = tpu.matmul %1, %11, %cst {dimension_numbers = #tpu.dot_dimension_numbers<[1], [0], [0], [1], [0, 0, 1, 1], [], []>} : vector<128x128xbf16>, vector<128x128xbf16>, vector<128x128xf32> -> vector<128x128xf32>
    %c0_13 = arith.constant 0 : index
    %c0_14 = arith.constant 0 : index
    %13 = vector.load %arg4[%c0_13, %c0_14] : memref<16x128xbf16, #tpu.memory_space<vmem>>, vector<16x128xbf16>
    %cst_15 = arith.constant dense<0.000000e+00> : vector<128x128xf32>
    %14 = tpu.matmul %3, %13, %cst_15 {dimension_numbers = #tpu.dot_dimension_numbers<[1], [0], [0], [1], [0, 0, 1, 1], [], []>} : vector<128x16xbf16>, vector<16x128xbf16>, vector<128x128xf32> -> vector<128x128xf32>
    %15 = arith.addf %12, %14 : vector<128x128xf32>
    %16 = vector.broadcast %4 : vector<1x128xf32> to vector<128x128xf32>
    %17 = arith.addf %15, %16 : vector<128x128xf32>
    %cst_16 = arith.constant dense<0.000000e+00> : vector<128xf32>
    %18 = vector.multi_reduction <add>, %17, %cst_16 [1] : vector<128x128xf32> to vector<128xf32>
    %19 = vector.shape_cast %18 : vector<128xf32> to vector<128x1xf32>
    %20 = arith.mulf %17, %17 : vector<128x128xf32>
    %cst_17 = arith.constant dense<0.000000e+00> : vector<128xf32>
    %21 = vector.multi_reduction <add>, %20, %cst_17 [1] : vector<128x128xf32> to vector<128xf32>
    %22 = vector.shape_cast %21 : vector<128xf32> to vector<128x1xf32>
    %cst_18 = arith.constant 7.812500e-03 : f32
    %23 = vector.broadcast %cst_18 : f32 to vector<128x1xf32>
    %24 = arith.mulf %19, %23 : vector<128x1xf32>
    %cst_19 = arith.constant 7.812500e-03 : f32
    %25 = vector.broadcast %cst_19 : f32 to vector<128x1xf32>
    %26 = arith.mulf %22, %25 : vector<128x1xf32>
    %27 = arith.mulf %24, %24 : vector<128x1xf32>
    %28 = arith.subf %26, %27 : vector<128x1xf32>
    %cst_20 = arith.constant 0.000000e+00 : f32
    %29 = vector.broadcast %cst_20 : f32 to vector<128x1xf32>
    %30 = arith.maximumf %28, %29 : vector<128x1xf32>
    %cst_21 = arith.constant 9.99999974E-6 : f32
    %31 = vector.broadcast %cst_21 : f32 to vector<128x1xf32>
    %32 = arith.addf %30, %31 : vector<128x1xf32>
    %33 = math.rsqrt %32 : vector<128x1xf32>
    %34 = vector.broadcast %24 : vector<128x1xf32> to vector<128x128xf32>
    %35 = arith.subf %17, %34 : vector<128x128xf32>
    %36 = vector.broadcast %33 : vector<128x1xf32> to vector<128x128xf32>
    %37 = arith.mulf %35, %36 : vector<128x128xf32>
    %38 = vector.broadcast %5 : vector<1x128xf32> to vector<128x128xf32>
    %39 = arith.mulf %37, %38 : vector<128x128xf32>
    %40 = vector.broadcast %6 : vector<1x128xf32> to vector<128x128xf32>
    %41 = arith.addf %39, %40 : vector<128x128xf32>
    %cst_22 = arith.constant 2.000000e+01 : f32
    %42 = vector.broadcast %cst_22 : f32 to vector<128x128xf32>
    %43 = arith.minimumf %41, %42 : vector<128x128xf32>
    %44 = math.exp %43 : vector<128x128xf32>
    %cst_23 = arith.constant 2.000000e+00 : f32
    %45 = vector.broadcast %cst_23 : f32 to vector<128x128xf32>
    %46 = arith.addf %44, %45 : vector<128x128xf32>
    %47 = arith.mulf %44, %46 : vector<128x128xf32>
    %48 = arith.mulf %41, %47 : vector<128x128xf32>
    %cst_24 = arith.constant 2.000000e+00 : f32
    %49 = vector.broadcast %cst_24 : f32 to vector<128x128xf32>
    %50 = arith.addf %47, %49 : vector<128x128xf32>
    %51 = tpu.reciprocal %50 {approx = true} : vector<128x128xf32> -> vector<128x128xf32>
    %52 = arith.mulf %48, %51 : vector<128x128xf32>
    %53 = arith.truncf %52 : vector<128x128xf32> to vector<128x128xbf16>
    %c0_25 = arith.constant 0 : index
    %c0_26 = arith.constant 0 : index
    %54 = vector.load %arg5[%c0_25, %c0_26] : memref<128x128xbf16, #tpu.memory_space<vmem>>, vector<128x128xbf16>
    %cst_27 = arith.constant dense<0.000000e+00> : vector<128x128xf32>
    %55 = tpu.matmul %53, %54, %cst_27 {dimension_numbers = #tpu.dot_dimension_numbers<[1], [0], [0], [1], [0, 0, 1, 1], [], []>} : vector<128x128xbf16>, vector<128x128xbf16>, vector<128x128xf32> -> vector<128x128xf32>
    %56 = vector.broadcast %7 : vector<1x128xf32> to vector<128x128xf32>
    %57 = arith.addf %55, %56 : vector<128x128xf32>
    %cst_28 = arith.constant dense<0.000000e+00> : vector<128xf32>
    %58 = vector.multi_reduction <add>, %57, %cst_28 [1] : vector<128x128xf32> to vector<128xf32>
    %59 = vector.shape_cast %58 : vector<128xf32> to vector<128x1xf32>
    %60 = arith.mulf %57, %57 : vector<128x128xf32>
    %cst_29 = arith.constant dense<0.000000e+00> : vector<128xf32>
    %61 = vector.multi_reduction <add>, %60, %cst_29 [1] : vector<128x128xf32> to vector<128xf32>
    %62 = vector.shape_cast %61 : vector<128xf32> to vector<128x1xf32>
    %cst_30 = arith.constant 7.812500e-03 : f32
    %63 = vector.broadcast %cst_30 : f32 to vector<128x1xf32>
    %64 = arith.mulf %59, %63 : vector<128x1xf32>
    %cst_31 = arith.constant 7.812500e-03 : f32
    %65 = vector.broadcast %cst_31 : f32 to vector<128x1xf32>
    %66 = arith.mulf %62, %65 : vector<128x1xf32>
    %67 = arith.mulf %64, %64 : vector<128x1xf32>
    %68 = arith.subf %66, %67 : vector<128x1xf32>
    %cst_32 = arith.constant 0.000000e+00 : f32
    %69 = vector.broadcast %cst_32 : f32 to vector<128x1xf32>
    %70 = arith.maximumf %68, %69 : vector<128x1xf32>
    %cst_33 = arith.constant 9.99999974E-6 : f32
    %71 = vector.broadcast %cst_33 : f32 to vector<128x1xf32>
    %72 = arith.addf %70, %71 : vector<128x1xf32>
    %73 = math.rsqrt %72 : vector<128x1xf32>
    %74 = vector.broadcast %64 : vector<128x1xf32> to vector<128x128xf32>
    %75 = arith.subf %57, %74 : vector<128x128xf32>
    %76 = vector.broadcast %73 : vector<128x1xf32> to vector<128x128xf32>
    %77 = arith.mulf %75, %76 : vector<128x128xf32>
    %78 = vector.broadcast %8 : vector<1x128xf32> to vector<128x128xf32>
    %79 = arith.mulf %77, %78 : vector<128x128xf32>
    %80 = vector.broadcast %9 : vector<1x128xf32> to vector<128x128xf32>
    %81 = arith.addf %79, %80 : vector<128x128xf32>
    %cst_34 = arith.constant 2.000000e+01 : f32
    %82 = vector.broadcast %cst_34 : f32 to vector<128x128xf32>
    %83 = arith.minimumf %81, %82 : vector<128x128xf32>
    %84 = math.exp %83 : vector<128x128xf32>
    %cst_35 = arith.constant 2.000000e+00 : f32
    %85 = vector.broadcast %cst_35 : f32 to vector<128x128xf32>
    %86 = arith.addf %84, %85 : vector<128x128xf32>
    %87 = arith.mulf %84, %86 : vector<128x128xf32>
    %88 = arith.mulf %81, %87 : vector<128x128xf32>
    %cst_36 = arith.constant 2.000000e+00 : f32
    %89 = vector.broadcast %cst_36 : f32 to vector<128x128xf32>
    %90 = arith.addf %87, %89 : vector<128x128xf32>
    %91 = tpu.reciprocal %90 {approx = true} : vector<128x128xf32> -> vector<128x128xf32>
    %92 = arith.mulf %88, %91 : vector<128x128xf32>
    %cst_37 = arith.constant dense<0.000000e+00> : vector<1x128xf32>
    %93 = tpu.matmul %10, %92, %cst_37 {dimension_numbers = #tpu.dot_dimension_numbers<[1], [1], [0], [0], [0, 0, 1, 0], [], []>} : vector<1x128xf32>, vector<128x128xf32>, vector<1x128xf32> -> vector<1x128xf32>
    %c0_38 = arith.constant 0 : index
    %94 = memref.load %arg7[%c0_38] : memref<1xf32, #tpu.memory_space<smem>>
    %95 = vector.broadcast %94 : f32 to vector<1x128xf32>
    %96 = arith.addf %93, %95 : vector<1x128xf32>
    %c0_39 = arith.constant 0 : index
    %c0_40 = arith.constant 0 : index
    %97 = vector.load %arg8[%c0_39, %c0_40] : memref<1x128xf32, #tpu.memory_space<vmem>>, vector<1x128xf32>
    tpu.vector_store %arg8[%c0_39, %c0_40], %96 {strides = array<i32>} : memref<1x128xf32, #tpu.memory_space<vmem>>, vector<1x128xf32>,
    return
  }
  func.func @transform_0(%arg0: i32) -> (i32, i32) {
    %c0_i32 = arith.constant 0 : i32
    %c0_i32_0 = arith.constant 0 : i32
    return %arg0, %c0_i32 : i32, i32
  }
  func.func @transform_1(%arg0: i32) -> (i32, i32) {
    %c0_i32 = arith.constant 0 : i32
    %c0_i32_0 = arith.constant 0 : i32
    return %arg0, %c0_i32 : i32, i32
  }
  func.func @transform_2(%arg0: i32) -> (i32, i32) {
    %c0_i32 = arith.constant 0 : i32
    %c0_i32_0 = arith.constant 0 : i32
    %c0_i32_1 = arith.constant 0 : i32
    return %c0_i32, %c0_i32_0 : i32, i32
  }
  func.func @transform_3(%arg0: i32) -> (i32, i32) {
    %c0_i32 = arith.constant 0 : i32
    %c0_i32_0 = arith.constant 0 : i32
    %c0_i32_1 = arith.constant 0 : i32
    return %c0_i32, %c0_i32_0 : i32, i32
  }
  func.func @transform_4(%arg0: i32) -> (i32, i32) {
    %c0_i32 = arith.constant 0 : i32
    %c0_i32_0 = arith.constant 0 : i32
    %c0_i32_1 = arith.constant 0 : i32
    return %c0_i32, %c0_i32_0 : i32, i32
  }
  func.func @transform_5(%arg0: i32) -> (i32, i32) {
    %c0_i32 = arith.constant 0 : i32
    %c0_i32_0 = arith.constant 0 : i32
    %c0_i32_1 = arith.constant 0 : i32
    return %c0_i32, %c0_i32_0 : i32, i32
  }
  func.func @transform_6(%arg0: i32) -> i32 {
    %c0_i32 = arith.constant 0 : i32
    %c0_i32_0 = arith.constant 0 : i32
    return %c0_i32 : i32
  }
  func.func @transform_7(%arg0: i32) -> (i32, i32) {
    %c0_i32 = arith.constant 0 : i32
    %c0_i32_0 = arith.constant 0 : i32
    return %c0_i32, %arg0 : i32, i32
  }
}

</mosaic_0001>

<llo_original>
// kernel: tpu_custom_call.1
$region0: #{tpu_custom_call.1}
  #allocation0 [shape = 'u32[]', space=smem, size = 0x4, offset = 0x4, fixed_abs, tag = 'smem constant byte address 0x4 - core index']
  #allocation1 [shape = 'u32[144,128]{1,0:T(1,128)}', space=vmem, size = 0x12000, scoped, tag = 'internal scratch']
  #allocation2 [shape = 'f32[1]{0:T(128)S(6)}', space=smem, size = 0x200, scoped, tag = 'scoped memory for tpu_custom_call.1']
  %s0 = inlined_call_operand.vmem [shape: f32[512,128], index: 0, kind: input, shape index: {}]
  %s1 = inlined_call_operand.vmem [shape: f32[512,16], index: 1, kind: input, shape index: {}]
  %s2 = inlined_call_operand.vmem [shape: bf16[128,128], index: 2, kind: input, shape index: {}]
  %s3 = inlined_call_operand.vmem [shape: bf16[16,128], index: 3, kind: input, shape index: {}]
  %s4 = inlined_call_operand.hbm [shape: bf16[128,128], index: 4, kind: input, shape index: {}]
  %s5 = inlined_call_operand.vmem [shape: f32[8,128], index: 5, kind: input, shape index: {}]
  %s6 = inlined_call_operand.<no memory space> [shape: f32[1], index: 6, kind: input, shape index: {}]
  %s7 = inlined_call_operand.hbm [shape: f32[1,512], index: 7, kind: output, shape index: {}]
  %s8 = sld [smem:[#allocation0]]
  $region65: #{tpu_custom_call.1} parent=0
    _
  %s10 = ssub.s32 1, %s8
  %s11 = scalar_select 0, %s10, %s8
  %12 = sst [smem:[#allocation2]] %s6
  $region1: #{tpu_custom_call.1} parent=0
    #allocation3 [shape = 'u8[32768]{0}', space=vmem, size = 0x8000, scoped, tag = 'input window, operand 4, single buffered']
    #allocation4 [shape = 's32[2]{0}', space=sflag, size = 0x8, scoped, tag = 'scoped memory for tpu_custom_call.1']
    #allocation5 [shape = 's32[2]{0}', space=sflag, size = 0x8, scoped, tag = 'scoped memory for tpu_custom_call.1']
    #allocation6 [shape = 'u8[1024]{0}', space=vmem, size = 0x400, scoped, tag = 'output window, operand 0']
    %13 = vsyncpa [#allocation4], 0
    %14 = vsyncpa [#allocation5], 0
    %s15 = scalar_lea.sflag [#allocation5], 1
    %16 = vsyncpa %s15, 0
    loop: start=0, step=1, limit=6
    $region2: #{tpu_custom_call.1} parent=1 // loop_pre_header
      _
    $region3: #{tpu_custom_call.1} parent=1 // loop_header
      %s18 = sphi 0, %s22
      %p19 = scmp.ge.s32.totalorder %s18, 6
      %s28 = sphi 0, %s30
      %s31 = sphi 0, %s28
      %s32 = sphi 0, %s31
      %s48 = sphi 0, %s32
      %s54 = sphi 0, %s56
      %s57 = sphi 0, %s54
      %s58 = sphi 0, %s57
      %s74 = sphi 0, %s58
      %s78 = sphi 0, %s78
      %s80 = sphi 0, %s78
      %s81 = sphi 0, %s80
      %s95 = sphi 0, %s81
      %s99 = sphi 0, %s99
      %s101 = sphi 0, %s99
      %s102 = sphi 0, %s101
      %s116 = sphi 0, %s102
      %s120 = sphi 0, %s120
      %s122 = sphi 0, %s120
      %s123 = sphi 0, %s122
      %s137 = sphi 0, %s123
      %s141 = sphi 0, %s141
      %s143 = sphi 0, %s141
      %s144 = sphi 0, %s143
      %s158 = sphi 0, %s144
      %s162 = sphi 0, %s162
      %s164 = sphi 0, %s162
      %s165 = sphi 0, %s164
      %s179 = sphi 0, %s165
      %s185 = sphi 0, %s187
      %s188 = sphi 0, %s185
      %s189 = sphi 0, %s188
      %s205 = sphi 0, %s189
    $region4: #{tpu_custom_call.1} parent=1 // loop_header_branch
      %21 = sbr.rel (%p19) target = $region8
    $region5: #{tpu_custom_call.1} parent=1 // loop_body
      %s23 = ssub.s32 %s18, 1
      %s24 = ssub.s32 %s18, 2
      %s25 = sadd.s32 %s18, 1
      %s26 = ssub.s32 %s18, %s25
      %p27 = scmp.eq.s32.totalorder %s26, 0
      %s29 = sadd.s32 %s28, 1
      %s30 = scalar_select %p27, %s28, %s29
      %p33 = pneg %p27
      %p34 = scmp.eq.s32.totalorder %s18, 3
      %p35 = por %p33, %p34
      %p36 = scmp.ne.s32.totalorder %s28, %s31
      %p37 = scmp.eq.s32.totalorder %s18, 0
      %p38 = por %p36, %p37
      %p39 = scmp.ne.s32.totalorder %s28, %s31
      %p40 = scmp.eq.s32.totalorder %s23, 3
      %p41 = por %p39, %p40
      %p42 = scmp.ne.s32.totalorder %s31, %s32
      %p43 = scmp.eq.s32.totalorder %s23, 0
      %p44 = por %p42, %p43
      %p45 = scmp.ne.s32.totalorder %s31, %s32
      %p46 = scmp.eq.s32.totalorder %s24, 3
      %p47 = por %p45, %p46
      %p49 = scmp.ne.s32.totalorder %s32, %s48
      %p50 = scmp.eq.s32.totalorder %s24, 0
      %p51 = por %p49, %p50
      %s52 = ssub.s32 %s18, %s25
      %p53 = scmp.eq.s32.totalorder %s52, 0
      %s55 = sadd.s32 %s54, 1
      %s56 = scalar_select %p53, %s54, %s55
      %p59 = pneg %p53
      %p60 = scmp.eq.s32.totalorder %s18, 3
      %p61 = por %p59, %p60
      %p62 = scmp.ne.s32.totalorder %s54, %s57
      %p63 = scmp.eq.s32.totalorder %s18, 0
      %p64 = por %p62, %p63
      %p65 = scmp.ne.s32.totalorder %s54, %s57
      %p66 = scmp.eq.s32.totalorder %s23, 3
      %p67 = por %p65, %p66
      %p68 = scmp.ne.s32.totalorder %s57, %s58
      %p69 = scmp.eq.s32.totalorder %s23, 0
      %p70 = por %p68, %p69
      %p71 = scmp.ne.s32.totalorder %s57, %s58
      %p72 = scmp.eq.s32.totalorder %s24, 3
      %p73 = por %p71, %p72
      %p75 = scmp.ne.s32.totalorder %s58, %s74
      %p76 = scmp.eq.s32.totalorder %s24, 0
      %p77 = por %p75, %p76
      %s79 = sadd.s32 %s78, 1
      %p82 = scmp.eq.s32.totalorder %s18, 3
      %p83 = scmp.ne.s32.totalorder %s78, %s80
      %p84 = scmp.eq.s32.totalorder %s18, 0
      %p85 = por %p83, %p84
      %p86 = scmp.ne.s32.totalorder %s78, %s80
      %p87 = scmp.eq.s32.totalorder %s23, 3
      %p88 = por %p86, %p87
      %p89 = scmp.ne.s32.totalorder %s80, %s81
      %p90 = scmp.eq.s32.totalorder %s23, 0
      %p91 = por %p89, %p90
      %p92 = scmp.ne.s32.totalorder %s80, %s81
      %p93 = scmp.eq.s32.totalorder %s24, 3
      %p94 = por %p92, %p93
      %p96 = scmp.ne.s32.totalorder %s81, %s95
      %p97 = scmp.eq.s32.totalorder %s24, 0
      %p98 = por %p96, %p97
      %s100 = sadd.s32 %s99, 1
      %p103 = scmp.eq.s32.totalorder %s18, 3
      %p104 = scmp.ne.s32.totalorder %s99, %s101
      %p105 = scmp.eq.s32.totalorder %s18, 0
      %p106 = por %p104, %p105
      %p107 = scmp.ne.s32.totalorder %s99, %s101
      %p108 = scmp.eq.s32.totalorder %s23, 3
      %p109 = por %p107, %p108
      %p110 = scmp.ne.s32.totalorder %s101, %s102
      %p111 = scmp.eq.s32.totalorder %s23, 0
      %p112 = por %p110, %p111
      %p113 = scmp.ne.s32.totalorder %s101, %s102
      %p114 = scmp.eq.s32.totalorder %s24, 3
      %p115 = por %p113, %p114
      %p117 = scmp.ne.s32.totalorder %s102, %s116
      %p118 = scmp.eq.s32.totalorder %s24, 0
      %p119 = por %p117, %p118
      %s121 = sadd.s32 %s120, 1
      %p124 = scmp.eq.s32.totalorder %s18, 3
      %p125 = scmp.ne.s32.totalorder %s120, %s122
      %p126 = scmp.eq.s32.totalorder %s18, 0
      %p127 = por %p125, %p126
      %p128 = scmp.ne.s32.totalorder %s120, %s122
      %p129 = scmp.eq.s32.totalorder %s23, 3
      %p130 = por %p128, %p129
      %p131 = scmp.ne.s32.totalorder %s122, %s123
      %p132 = scmp.eq.s32.totalorder %s23, 0
      %p133 = por %p131, %p132
      %p134 = scmp.ne.s32.totalorder %s122, %s123
      %p135 = scmp.eq.s32.totalorder %s24, 3
      %p136 = por %p134, %p135
      %p138 = scmp.ne.s32.totalorder %s123, %s137
      %p139 = scmp.eq.s32.totalorder %s24, 0
      %p140 = por %p138, %p139
      %s142 = sadd.s32 %s141, 1
      %p145 = scmp.eq.s32.totalorder %s18, 3
      %p146 = scmp.ne.s32.totalorder %s141, %s143
      %p147 = scmp.eq.s32.totalorder %s18, 0
      %p148 = por %p146, %p147
      %p149 = scmp.ne.s32.totalorder %s141, %s143
      %p150 = scmp.eq.s32.totalorder %s23, 3
      %p151 = por %p149, %p150
      %p152 = scmp.ne.s32.totalorder %s143, %s144
      %p153 = scmp.eq.s32.totalorder %s23, 0
      %p154 = por %p152, %p153
      %p155 = scmp.ne.s32.totalorder %s143, %s144
      %p156 = scmp.eq.s32.totalorder %s24, 3
      %p157 = por %p155, %p156
      %p159 = scmp.ne.s32.totalorder %s144, %s158
      %p160 = scmp.eq.s32.totalorder %s24, 0
      %p161 = por %p159, %p160
      %s163 = sadd.s32 %s162, 1
      %p166 = scmp.eq.s32.totalorder %s18, 3
      %p167 = scmp.ne.s32.totalorder %s162, %s164
      %p168 = scmp.eq.s32.totalorder %s18, 0
      %p169 = por %p167, %p168
      %p170 = scmp.ne.s32.totalorder %s162, %s164
      %p171 = scmp.eq.s32.totalorder %s23, 3
      %p172 = por %p170, %p171
      %p173 = scmp.ne.s32.totalorder %s164, %s165
      %p174 = scmp.eq.s32.totalorder %s23, 0
      %p175 = por %p173, %p174
      %p176 = scmp.ne.s32.totalorder %s164, %s165
      %p177 = scmp.eq.s32.totalorder %s24, 3
      %p178 = por %p176, %p177
      %p180 = scmp.ne.s32.totalorder %s165, %s179
      %p181 = scmp.eq.s32.totalorder %s24, 0
      %p182 = por %p180, %p181
      %s183 = ssub.s32 %s18, %s25
      %p184 = scmp.eq.s32.totalorder %s183, 0
      %s186 = sadd.s32 %s185, 1
      %s187 = scalar_select %p184, %s185, %s186
      %p190 = pneg %p184
      %p191 = scmp.eq.s32.totalorder %s18, 3
      %p192 = por %p190, %p191
      %p193 = scmp.ne.s32.totalorder %s185, %s188
      %p194 = scmp.eq.s32.totalorder %s18, 0
      %p195 = por %p193, %p194
      %p196 = scmp.ne.s32.totalorder %s185, %s188
      %p197 = scmp.eq.s32.totalorder %s23, 3
      %p198 = por %p196, %p197
      %p199 = scmp.ne.s32.totalorder %s188, %s189
      %p200 = scmp.eq.s32.totalorder %s23, 0
      %p201 = por %p199, %p200
      %p202 = scmp.ne.s32.totalorder %s188, %s189
      %p203 = scmp.eq.s32.totalorder %s24, 3
      %p204 = por %p202, %p203
      %p206 = scmp.ne.s32.totalorder %s189, %s205
      %p207 = scmp.eq.s32.totalorder %s24, 0
      %p208 = por %p206, %p207
      %p209 = scmp.le.s32.totalorder 1, %s18
      %p210 = scmp.lt.s32.totalorder %s18, 5
      %p211 = pnand %p209, %p210
      %p212 = pneg %p211
      // Predicated region
      $region9: #{tpu_custom_call.1} parent=5 // pred_check
        _
      $region10: #{tpu_custom_call.1} parent=5 // pred_check_branch
        %214 = sbr.rel (%p211) target = $region12
      $region11: #{tpu_custom_call.1} parent=5 // pred_region
        %s215 = ssub.s32 %s18, 1
        // Predicated region
        $region13: #{tpu_custom_call.1} parent=11 // pred_check
          %p216 = pneg %p91
        $region14: #{tpu_custom_call.1} parent=11 // pred_check_branch
          %218 = sbr.rel (%p216) target = $region16
        $region15: #{tpu_custom_call.1} parent=11 // pred_region
          _
        $region16: #{tpu_custom_call.1} parent=11 // pred_fallthru
          _
        // Predicated region
        $region17: #{tpu_custom_call.1} parent=11 // pred_check
          %p219 = pneg %p112
        $region18: #{tpu_custom_call.1} parent=11 // pred_check_branch
          %221 = sbr.rel (%p219) target = $region20
        $region19: #{tpu_custom_call.1} parent=11 // pred_region
          _
        $region20: #{tpu_custom_call.1} parent=11 // pred_fallthru
          _
        // Predicated region
        $region21: #{tpu_custom_call.1} parent=11 // pred_check
          %p222 = pneg %p133
        $region22: #{tpu_custom_call.1} parent=11 // pred_check_branch
          %224 = sbr.rel (%p222) target = $region24
        $region23: #{tpu_custom_call.1} parent=11 // pred_region
          %s226 = ssub.s32 1024, 1024
          %227 = vsyncadd [#allocation4], %s226
          %s228 = sshll.u32 [#allocation3], 4
          %s229 = int_to_ptr.vmem [resolvable:$true] %s228
          %234 = dma.hbm_to_vmem [thread:$0]  %s4, 1024, %s229, [#allocation4], 64, 64, 4
        $region24: #{tpu_custom_call.1} parent=11 // pred_fallthru
          _
        // Predicated region
        $region25: #{tpu_custom_call.1} parent=11 // pred_check
          %p235 = pneg %p154
        $region26: #{tpu_custom_call.1} parent=11 // pred_check_branch
          %237 = sbr.rel (%p235) target = $region28
        $region27: #{tpu_custom_call.1} parent=11 // pred_region
          _
        $region28: #{tpu_custom_call.1} parent=11 // pred_fallthru
          _
        // Predicated region
        $region29: #{tpu_custom_call.1} parent=11 // pred_check
          %p238 = pneg %p175
        $region30: #{tpu_custom_call.1} parent=11 // pred_check_branch
          %240 = sbr.rel (%p238) target = $region32
        $region31: #{tpu_custom_call.1} parent=11 // pred_region
          _
        $region32: #{tpu_custom_call.1} parent=11 // pred_fallthru
          _
      $region12: #{tpu_custom_call.1} parent=5 // pred_fallthru
        _
      %p241 = scmp.lt.s32.totalorder %s18, 4
      // Predicated region
      $region33: #{tpu_custom_call.1} parent=5 // pred_check
        %p242 = pneg %p241
      $region34: #{tpu_custom_call.1} parent=5 // pred_check_branch
        %244 = sbr.rel (%p242) target = $region36
      $region35: #{tpu_custom_call.1} parent=5 // pred_region
        // Predicated region
        $region37: #{tpu_custom_call.1} parent=35 // pred_check
          %p245 = pneg %p38
        $region38: #{tpu_custom_call.1} parent=35 // pred_check_branch
          %247 = sbr.rel (%p245) target = $region40
        $region39: #{tpu_custom_call.1} parent=35 // pred_region
          %s248 = smul.u32 16, %s18
          %p249 = scmp.lt.s32.totalorder %s248, 63
          %s250 = scalar_select %p249, %s248, 63
          %s251 = smul.addr %s250, 8
          %s252 = scalar_lea.vmem %s0, %s251
          %s253 = smul.u32 16, %s18
        $region40: #{tpu_custom_call.1} parent=35 // pred_fallthru
          _
        // Predicated region
        $region41: #{tpu_custom_call.1} parent=35 // pred_check
          %p254 = pneg %p64
        $region42: #{tpu_custom_call.1} parent=35 // pred_check_branch
          %256 = sbr.rel (%p254) target = $region44
        $region43: #{tpu_custom_call.1} parent=35 // pred_region
          %s257 = smul.u32 16, %s18
          %p258 = scmp.lt.s32.totalorder %s257, 63
          %s259 = scalar_select %p258, %s257, 63
          %s260 = smul.addr %s259, 8
          %s261 = scalar_lea.vmem %s1, %s260
          %s262 = smul.u32 16, %s18
        $region44: #{tpu_custom_call.1} parent=35 // pred_fallthru
          _
      $region36: #{tpu_custom_call.1} parent=5 // pred_fallthru
        _
      %p263 = scmp.le.s32.totalorder 1, %s18
      %p264 = scmp.lt.s32.totalorder %s18, 5
      %p265 = pnand %p263, %p264
      %p266 = pneg %p265
      // Predicated region
      $region45: #{tpu_custom_call.1} parent=5 // pred_check
        _
      $region46: #{tpu_custom_call.1} parent=5 // pred_check_branch
        %268 = sbr.rel (%p265) target = $region48
      $region47: #{tpu_custom_call.1} parent=5 // pred_region
        %s269 = ssub.s32 %s18, 1
        // Predicated region
        $region49: #{tpu_custom_call.1} parent=47 // pred_check
          %p270 = pneg %p133
        $region50: #{tpu_custom_call.1} parent=47 // pred_check_branch
          %272 = sbr.rel (%p270) target = $region52
        $region51: #{tpu_custom_call.1} parent=47 // pred_region
          %273 = dma.done [#allocation4], 1024
        $region52: #{tpu_custom_call.1} parent=47 // pred_fallthru
          _
        %s274 = smul.u32 16, %s23
        %p275 = scmp.lt.s32.totalorder %s274, 63
        %s276 = scalar_select %p275, %s274, 63
        %s277 = smul.addr %s276, 8
        %s278 = scalar_lea.vmem %s0, %s277
        %p279 = pneg %p44
        %p280 = pneg %p41
        %s281 = smul.u32 16, %s23
        %p282 = scmp.lt.s32.totalorder %s281, 63
        %s283 = scalar_select %p282, %s281, 63
        %s284 = smul.addr %s283, 8
        %s285 = scalar_lea.vmem %s1, %s284
        %p286 = pneg %p70
        %p287 = pneg %p67
        %p288 = pneg %p91
        %p289 = pneg %p88
        %p290 = pneg %p112
        %p291 = pneg %p109
        %p292 = pneg %p133
        %p293 = pneg %p130
        %p294 = pneg %p154
        %p295 = pneg %p151
        %p296 = pneg %p175
        %p297 = pneg %p172
        %p298 = pneg %p201
        %p299 = pneg %p198
        %s300 = sand.u32 %s188, 1
        %s301 = scalar_lea.sflag [#allocation5], %s300
        %s302 = sand.u32 %s188, 1
        %s303 = scalar_lea.vmem [#allocation6], %s302
        %s304 = smul.u32 16, %s23
        %p305 = scmp.lt.s32.totalorder %s304, 63
        %s306 = scalar_select %p305, %s304, 63
        %s307 = smul.addr %s306, 8
        %s308 = scalar_lea.vmem %s0, %s307
        %s309 = smul.u32 16, %s23
        %s310 = smul.u32 16, %s23
        %p311 = scmp.lt.s32.totalorder %s310, 63
        %s312 = scalar_select %p311, %s310, 63
        %s313 = smul.addr %s312, 8
        %s314 = scalar_lea.vmem %s1, %s313
        %s315 = smul.u32 16, %s23
        %v317 = vld [vmem:[%s308] sm:$0xff]
        %v318 = vld [vmem:[%s308 + $0x8] sm:$0xff]
        %v319 = vld [vmem:[%s308 + $0x10] sm:$0xff]
        %v320 = vld [vmem:[%s308 + $0x18] sm:$0xff]
        %v321 = vld [vmem:[%s308 + $0x20] sm:$0xff]
        %v322 = vld [vmem:[%s308 + $0x28] sm:$0xff]
        %v323 = vld [vmem:[%s308 + $0x30] sm:$0xff]
        %v324 = vld [vmem:[%s308 + $0x38] sm:$0xff]
        %v325 = vld [vmem:[%s308 + $0x40] sm:$0xff]
        %v326 = vld [vmem:[%s308 + $0x48] sm:$0xff]
        %v327 = vld [vmem:[%s308 + $0x50] sm:$0xff]
        %v328 = vld [vmem:[%s308 + $0x58] sm:$0xff]
        %v329 = vld [vmem:[%s308 + $0x60] sm:$0xff]
        %v330 = vld [vmem:[%s308 + $0x68] sm:$0xff]
        %v331 = vld [vmem:[%s308 + $0x70] sm:$0xff]
        %v332 = vld [vmem:[%s308 + $0x78] sm:$0xff]
        %v333 = vpack.c.bf16 %v318, %v317
        %v334 = vpack.c.bf16 %v320, %v319
        %v335 = vpack.c.bf16 %v322, %v321
        %v336 = vpack.c.bf16 %v324, %v323
        %v337 = vpack.c.bf16 %v326, %v325
        %v338 = vpack.c.bf16 %v328, %v327
        %v339 = vpack.c.bf16 %v330, %v329
        %v340 = vpack.c.bf16 %v332, %v331
        %v341 = vld [vmem:[%s314] sm:$0xff]
        %v342 = vld [vmem:[%s314 + $0x8] sm:$0xff]
        %v343 = vld [vmem:[%s314 + $0x10] sm:$0xff]
        %v344 = vld [vmem:[%s314 + $0x18] sm:$0xff]
        %v345 = vld [vmem:[%s314 + $0x20] sm:$0xff]
        %v346 = vld [vmem:[%s314 + $0x28] sm:$0xff]
        %v347 = vld [vmem:[%s314 + $0x30] sm:$0xff]
        %v348 = vld [vmem:[%s314 + $0x38] sm:$0xff]
        %v349 = vld [vmem:[%s314 + $0x40] sm:$0xff]
        %v350 = vld [vmem:[%s314 + $0x48] sm:$0xff]
        %v351 = vld [vmem:[%s314 + $0x50] sm:$0xff]
        %v352 = vld [vmem:[%s314 + $0x58] sm:$0xff]
        %v353 = vld [vmem:[%s314 + $0x60] sm:$0xff]
        %v354 = vld [vmem:[%s314 + $0x68] sm:$0xff]
        %v355 = vld [vmem:[%s314 + $0x70] sm:$0xff]
        %v356 = vld [vmem:[%s314 + $0x78] sm:$0xff]
        %v357 = vpack.c.bf16 %v342, %v341
        %v358 = vpack.c.bf16 %v344, %v343
        %v359 = vpack.c.bf16 %v346, %v345
        %v360 = vpack.c.bf16 %v348, %v347
        %v361 = vpack.c.bf16 %v350, %v349
        %v362 = vpack.c.bf16 %v352, %v351
        %v363 = vpack.c.bf16 %v354, %v353
        %v364 = vpack.c.bf16 %v356, %v355
        %v365 = vld [vmem:[%s5] sm:$0x1]
        %v366 = vld [vmem:[%s5 + $0x1] sm:$0x1]
        %v367 = vld [vmem:[%s5 + $0x2] sm:$0x1]
        %v368 = vld [vmem:[%s5 + $0x3] sm:$0x1]
        %v369 = vld [vmem:[%s5 + $0x4] sm:$0x1]
        %v370 = vld [vmem:[%s5 + $0x5] sm:$0x1]
        %v371 = vld [vmem:[%s5 + $0x6] sm:$0x1]
        %v372 = vld [vmem:[%s2] sm:$0xf]
        %v373 = vld [vmem:[%s2 + $0x4] sm:$0xf]
        %v374 = vld [vmem:[%s2 + $0x8] sm:$0xf]
        %v375 = vld [vmem:[%s2 + $0xc] sm:$0xf]
        %v376 = vld [vmem:[%s2 + $0x10] sm:$0xf]
        %v377 = vld [vmem:[%s2 + $0x14] sm:$0xf]
        %v378 = vld [vmem:[%s2 + $0x18] sm:$0xf]
        %v379 = vld [vmem:[%s2 + $0x1c] sm:$0xf]
        %v380 = vld [vmem:[%s2 + $0x20] sm:$0xf]
        %v381 = vld [vmem:[%s2 + $0x24] sm:$0xf]
        %v382 = vld [vmem:[%s2 + $0x28] sm:$0xf]
        %v383 = vld [vmem:[%s2 + $0x2c] sm:$0xf]
        %v384 = vld [vmem:[%s2 + $0x30] sm:$0xf]
        %v385 = vld [vmem:[%s2 + $0x34] sm:$0xf]
        %v386 = vld [vmem:[%s2 + $0x38] sm:$0xf]
        %v387 = vld [vmem:[%s2 + $0x3c] sm:$0xf]
        %v388 = vld [vmem:[%s3] sm:$0xf]
        %v389 = vld [vmem:[%s3 + $0x4] sm:$0xf]
        %v392 = vunpack.c.l.b16 %v388
        %v393 = vunpack.c.l.b16 %v389
        %v394 = vpack.c.b16 %v393, %v392
        %vm396 = vcmask 130048
        %v398 = vsel %vm396, %v357, 0
        %v401 = vsel %vm396, %v358, 0
        %v404 = vsel %vm396, %v359, 0
        %v407 = vsel %vm396, %v360, 0
        %v410 = vsel %vm396, %v361, 0
        %v413 = vsel %vm396, %v362, 0
        %v416 = vsel %vm396, %v363, 0
        %v419 = vsel %vm396, %v364, 0
        %421 = vmatprep.subr.bf16.mxu0 0
        %422 = vmatpush1.bf16.msra.mxu0 %v394
        %423 = vmatprep.subr.bf16.mxu0 0
        %424 = vmatpush1.bf16.msra.mxu0 0
        %425 = vmatprep.subr.bf16.mxu0 0
        %426 = vmatpush1.bf16.msra.mxu0 0
        %427 = vmatprep.subr.bf16.mxu0 0
        %428 = vmatpush1.bf16.msra.mxu0 0
        %429 = vmatprep.subr.bf16.mxu0 0
        %430 = vmatpush1.bf16.msra.mxu0 0
        %431 = vmatprep.subr.bf16.mxu0 0
        %432 = vmatpush1.bf16.msra.mxu0 0
        %433 = vmatprep.subr.bf16.mxu0 0
        %434 = vmatpush1.bf16.msra.mxu0 0
        %435 = vmatprep.subr.bf16.mxu0 0
        %436 = vmatpush1.bf16.msra.mxu0 0
        %437 = vmatprep.subr.bf16.mxu0 0
        %438 = vmatpush1.bf16.msra.mxu0 0
        %439 = vmatprep.subr.bf16.mxu0 0
        %440 = vmatpush1.bf16.msra.mxu0 0
        %441 = vmatprep.subr.bf16.mxu0 0
        %442 = vmatpush1.bf16.msra.mxu0 0
        %443 = vmatprep.subr.bf16.mxu0 0
        %444 = vmatpush1.bf16.msra.mxu0 0
        %445 = vmatprep.subr.bf16.mxu0 0
        %446 = vmatpush1.bf16.msra.mxu0 0
        %447 = vmatprep.subr.bf16.mxu0 0
        %448 = vmatpush1.bf16.msra.mxu0 0
        %449 = vmatprep.subr.bf16.mxu0 0
        %450 = vmatpush1.bf16.msra.mxu0 0
        %451 = vmatprep.subr.bf16.mxu0 0
        %452 = vmatpush1.bf16.msra.mxu0 0
        %453 = vmatprep.mubr.bf16.mxu0 0
        %454 = vmatmul.mubr.bf16.gmra.mrb[0].mxu0 %v398
        %v455 = vpop.f32.mrb[0].mxu0
        %v456 = vadd.f32 0.0, %v455
        %v457 = vpop.f32.mrb[0].mxu0
        %v458 = vpop.f32.mrb[0].mxu0
        %v459 = vadd.f32 0.0, %v458
        %v460 = vpop.f32.mrb[0].mxu0
        %461 = vmatprep.mubr.bf16.mxu0 0
        %462 = vmatmul.mubr.bf16.gmra.mrb[0].mxu0 %v401
        %v463 = vpop.f32.mrb[0].mxu0
        %v464 = vadd.f32 0.0, %v463
        %v465 = vpop.f32.mrb[0].mxu0
        %v466 = vpop.f32.mrb[0].mxu0
        %v467 = vadd.f32 0.0, %v466
        %v468 = vpop.f32.mrb[0].mxu0
        %469 = vmatprep.mubr.bf16.mxu0 0
        %470 = vmatmul.mubr.bf16.gmra.mrb[0].mxu0 %v404
        %v471 = vpop.f32.mrb[0].mxu0
        %v472 = vadd.f32 0.0, %v471
        %v473 = vpop.f32.mrb[0].mxu0
        %v474 = vpop.f32.mrb[0].mxu0
        %v475 = vadd.f32 0.0, %v474
        %v476 = vpop.f32.mrb[0].mxu0
        %477 = vmatprep.mubr.bf16.mxu0 0
        %478 = vmatmul.mubr.bf16.gmra.mrb[0].mxu0 %v407
        %v479 = vpop.f32.mrb[0].mxu0
        %v480 = vadd.f32 0.0, %v479
        %v481 = vpop.f32.mrb[0].mxu0
        %v482 = vpop.f32.mrb[0].mxu0
        %v483 = vadd.f32 0.0, %v482
        %v484 = vpop.f32.mrb[0].mxu0
        %485 = vmatprep.mubr.bf16.mxu0 0
        %486 = vmatmul.mubr.bf16.gmra.mrb[0].mxu0 %v410
        %v487 = vpop.f32.mrb[0].mxu0
        %v488 = vadd.f32 0.0, %v487
        %v489 = vpop.f32.mrb[0].mxu0
        %v490 = vpop.f32.mrb[0].mxu0
        %v491 = vadd.f32 0.0, %v490
        %v492 = vpop.f32.mrb[0].mxu0
        %493 = vmatprep.mubr.bf16.mxu0 0
        %494 = vmatmul.mubr.bf16.gmra.mrb[0].mxu0 %v413
        %v495 = vpop.f32.mrb[0].mxu0
        %v496 = vadd.f32 0.0, %v495
        %v497 = vpop.f32.mrb[0].mxu0
        %v498 = vpop.f32.mrb[0].mxu0
        %v499 = vadd.f32 0.0, %v498
        %v500 = vpop.f32.mrb[0].mxu0
        %501 = vmatprep.mubr.bf16.mxu0 0
        %502 = vmatmul.mubr.bf16.gmra.mrb[0].mxu0 %v416
        %v503 = vpop.f32.mrb[0].mxu0
        %v504 = vadd.f32 0.0, %v503
        %v505 = vpop.f32.mrb[0].mxu0
        %v506 = vpop.f32.mrb[0].mxu0
        %v507 = vadd.f32 0.0, %v506
        %v508 = vpop.f32.mrb[0].mxu0
        %509 = vmatprep.mubr.bf16.mxu0 0
        %510 = vmatmul.mubr.bf16.gmra.mrb[0].mxu0 %v419
        %v511 = vpop.f32.mrb[0].mxu0
        %v512 = vadd.f32 0.0, %v511
        %v513 = vpop.f32.mrb[0].mxu0
        %v514 = vpop.f32.mrb[0].mxu0
        %v515 = vadd.f32 0.0, %v514
        %v516 = vpop.f32.mrb[0].mxu0
        %517 = vdwg.mxu0
        %v534 = vunpack.c.l.b16 %v372
        %v535 = vunpack.c.l.b16 %v373
        %v536 = vunpack.c.l.b16 %v374
        %v537 = vunpack.c.l.b16 %v375
        %v538 = vunpack.c.l.b16 %v376
        %v539 = vunpack.c.l.b16 %v377
        %v540 = vunpack.c.l.b16 %v378
        %v541 = vunpack.c.l.b16 %v379
        %v542 = vunpack.c.l.b16 %v380
        %v543 = vunpack.c.l.b16 %v381
        %v544 = vunpack.c.l.b16 %v382
        %v545 = vunpack.c.l.b16 %v383
        %v546 = vunpack.c.l.b16 %v384
        %v547 = vunpack.c.l.b16 %v385
        %v548 = vunpack.c.l.b16 %v386
        %v549 = vunpack.c.l.b16 %v387
        %v550 = vpack.c.b16 %v535, %v534
        %v551 = vpack.c.b16 %v537, %v536
        %v552 = vpack.c.b16 %v539, %v538
        %v553 = vpack.c.b16 %v541, %v540
        %v554 = vpack.c.b16 %v543, %v542
        %v555 = vpack.c.b16 %v545, %v544
        %v556 = vpack.c.b16 %v547, %v546
        %v557 = vpack.c.b16 %v549, %v548
        %566 = vmatprep.subr.bf16.mxu0 0
        %567 = vmatpush1.bf16.msra.mxu0 %v550
        %568 = vmatprep.subr.bf16.mxu0 0
        %569 = vmatpush1.bf16.msra.mxu0 %v551
        %570 = vmatprep.subr.bf16.mxu0 0
        %571 = vmatpush1.bf16.msra.mxu0 %v552
        %572 = vmatprep.subr.bf16.mxu0 0
        %573 = vmatpush1.bf16.msra.mxu0 %v553
        %574 = vmatprep.subr.bf16.mxu0 0
        %575 = vmatpush1.bf16.msra.mxu0 %v554
        %576 = vmatprep.subr.bf16.mxu0 0
        %577 = vmatpush1.bf16.msra.mxu0 %v555
        %578 = vmatprep.subr.bf16.mxu0 0
        %579 = vmatpush1.bf16.msra.mxu0 %v556
        %580 = vmatprep.subr.bf16.mxu0 0
        %581 = vmatpush1.bf16.msra.mxu0 %v557
        %582 = vmatprep.subr.bf16.mxu0 0
        %583 = vmatpush1.bf16.msra.mxu0 0
        %584 = vmatprep.subr.bf16.mxu0 0
        %585 = vmatpush1.bf16.msra.mxu0 0
        %586 = vmatprep.subr.bf16.mxu0 0
        %587 = vmatpush1.bf16.msra.mxu0 0
        %588 = vmatprep.subr.bf16.mxu0 0
        %589 = vmatpush1.bf16.msra.mxu0 0
        %590 = vmatprep.subr.bf16.mxu0 0
        %591 = vmatpush1.bf16.msra.mxu0 0
        %592 = vmatprep.subr.bf16.mxu0 0
        %593 = vmatpush1.bf16.msra.mxu0 0
        %594 = vmatprep.subr.bf16.mxu0 0
        %595 = vmatpush1.bf16.msra.mxu0 0
        %596 = vmatprep.subr.bf16.mxu0 0
        %597 = vmatpush1.bf16.msra.mxu0 0
        %598 = vmatprep.mubr.bf16.mxu0 0
        %599 = vmatmul.mubr.bf16.gmra.mrb[0].mxu0 %v333
        %v600 = vpop.f32.mrb[0].mxu0
        %v601 = vadd.f32 %v456, %v600
        %v602 = vpop.f32.mrb[0].mxu0
        %v603 = vpop.f32.mrb[0].mxu0
        %v604 = vadd.f32 %v459, %v603
        %v605 = vpop.f32.mrb[0].mxu0
        %606 = vmatprep.mubr.bf16.mxu0 0
        %607 = vmatmul.mubr.bf16.gmra.mrb[0].mxu0 %v334
        %v608 = vpop.f32.mrb[0].mxu0
        %v609 = vadd.f32 %v464, %v608
        %v610 = vpop.f32.mrb[0].mxu0
        %v611 = vpop.f32.mrb[0].mxu0
        %v612 = vadd.f32 %v467, %v611
        %v613 = vpop.f32.mrb[0].mxu0
        %614 = vmatprep.mubr.bf16.mxu0 0
        %615 = vmatmul.mubr.bf16.gmra.mrb[0].mxu0 %v335
        %v616 = vpop.f32.mrb[0].mxu0
        %v617 = vadd.f32 %v472, %v616
        %v618 = vpop.f32.mrb[0].mxu0
        %v619 = vpop.f32.mrb[0].mxu0
        %v620 = vadd.f32 %v475, %v619
        %v621 = vpop.f32.mrb[0].mxu0
        %622 = vmatprep.mubr.bf16.mxu0 0
        %623 = vmatmul.mubr.bf16.gmra.mrb[0].mxu0 %v336
        %v624 = vpop.f32.mrb[0].mxu0
        %v625 = vadd.f32 %v480, %v624
        %v626 = vpop.f32.mrb[0].mxu0
        %v627 = vpop.f32.mrb[0].mxu0
        %v628 = vadd.f32 %v483, %v627
        %v629 = vpop.f32.mrb[0].mxu0
        %630 = vmatprep.mubr.bf16.mxu0 0
        %631 = vmatmul.mubr.bf16.gmra.mrb[0].mxu0 %v337
        %v632 = vpop.f32.mrb[0].mxu0
        %v633 = vadd.f32 %v488, %v632
        %v634 = vpop.f32.mrb[0].mxu0
        %v635 = vpop.f32.mrb[0].mxu0
        %v636 = vadd.f32 %v491, %v635
        %v637 = vpop.f32.mrb[0].mxu0
        %638 = vmatprep.mubr.bf16.mxu0 0
        %639 = vmatmul.mubr.bf16.gmra.mrb[0].mxu0 %v338
        %v640 = vpop.f32.mrb[0].mxu0
        %v641 = vadd.f32 %v496, %v640
        %v642 = vpop.f32.mrb[0].mxu0
        %v643 = vpop.f32.mrb[0].mxu0
        %v644 = vadd.f32 %v499, %v643
        %v645 = vpop.f32.mrb[0].mxu0
        %646 = vmatprep.mubr.bf16.mxu0 0
        %647 = vmatmul.mubr.bf16.gmra.mrb[0].mxu0 %v339
        %v648 = vpop.f32.mrb[0].mxu0
        %v649 = vadd.f32 %v504, %v648
        %v650 = vpop.f32.mrb[0].mxu0
        %v651 = vpop.f32.mrb[0].mxu0
        %v652 = vadd.f32 %v507, %v651
        %v653 = vpop.f32.mrb[0].mxu0
        %654 = vmatprep.mubr.bf16.mxu0 0
        %655 = vmatmul.mubr.bf16.gmra.mrb[0].mxu0 %v340
        %v656 = vpop.f32.mrb[0].mxu0
        %v657 = vadd.f32 %v512, %v656
        %v658 = vpop.f32.mrb[0].mxu0
        %v659 = vpop.f32.mrb[0].mxu0
        %v660 = vadd.f32 %v515, %v659
        %v661 = vpop.f32.mrb[0].mxu0
        %662 = vdwg.mxu0
        %v663 = vlaneseq
        %v664 = vshrl.u32 %v663, 7
        %v665 = vsub.s32 0, %v664
        %v666 = vrot.slane %v365, %v665
        %v667 = vadd.f32 %v601, %v666
        %v668 = vadd.f32 %v604, %v666
        %v669 = vadd.f32 %v609, %v666
        %v670 = vadd.f32 %v612, %v666
        %v671 = vadd.f32 %v617, %v666
        %v672 = vadd.f32 %v620, %v666
        %v673 = vadd.f32 %v625, %v666
        %v674 = vadd.f32 %v628, %v666
        %v675 = vadd.f32 %v633, %v666
        %v676 = vadd.f32 %v636, %v666
        %v677 = vadd.f32 %v641, %v666
        %v678 = vadd.f32 %v644, %v666
        %v679 = vadd.f32 %v649, %v666
        %v680 = vadd.f32 %v652, %v666
        %v681 = vadd.f32 %v657, %v666
        %v682 = vadd.f32 %v660, %v666
        %683 = vadd.xlane.f32.xlu0 %v667
        %v684 = vpop.xlane.xlu0 %683
        %685 = vadd.xlane.f32.xlu0 %v668
        %v686 = vpop.xlane.xlu0 %685
        %687 = vadd.xlane.f32.xlu0 %v669
        %v688 = vpop.xlane.xlu0 %687
        %689 = vadd.xlane.f32.xlu0 %v670
        %v690 = vpop.xlane.xlu0 %689
        %691 = vadd.xlane.f32.xlu0 %v671
        %v692 = vpop.xlane.xlu0 %691
        %693 = vadd.xlane.f32.xlu0 %v672
        %v694 = vpop.xlane.xlu0 %693
        %695 = vadd.xlane.f32.xlu0 %v673
        %v696 = vpop.xlane.xlu0 %695
        %697 = vadd.xlane.f32.xlu0 %v674
        %v698 = vpop.xlane.xlu0 %697
        %699 = vadd.xlane.f32.xlu0 %v675
        %v700 = vpop.xlane.xlu0 %699
        %701 = vadd.xlane.f32.xlu0 %v676
        %v702 = vpop.xlane.xlu0 %701
        %703 = vadd.xlane.f32.xlu0 %v677
        %v704 = vpop.xlane.xlu0 %703
        %705 = vadd.xlane.f32.xlu0 %v678
        %v706 = vpop.xlane.xlu0 %705
        %707 = vadd.xlane.f32.xlu0 %v679
        %v708 = vpop.xlane.xlu0 %707
        %709 = vadd.xlane.f32.xlu0 %v680
        %v710 = vpop.xlane.xlu0 %709
        %711 = vadd.xlane.f32.xlu0 %v681
        %v712 = vpop.xlane.xlu0 %711
        %713 = vadd.xlane.f32.xlu0 %v682
        %v714 = vpop.xlane.xlu0 %713
        %v715 = vmul.f32 %v667, %v667
        %v716 = vmul.f32 %v668, %v668
        %v717 = vmul.f32 %v669, %v669
        %v718 = vmul.f32 %v670, %v670
        %v719 = vmul.f32 %v671, %v671
        %v720 = vmul.f32 %v672, %v672
        %v721 = vmul.f32 %v673, %v673
        %v722 = vmul.f32 %v674, %v674
        %v723 = vmul.f32 %v675, %v675
        %v724 = vmul.f32 %v676, %v676
        %v725 = vmul.f32 %v677, %v677
        %v726 = vmul.f32 %v678, %v678
        %v727 = vmul.f32 %v679, %v679
        %v728 = vmul.f32 %v680, %v680
        %v729 = vmul.f32 %v681, %v681
        %v730 = vmul.f32 %v682, %v682
        %731 = vadd.xlane.f32.xlu0 %v715
        %v732 = vpop.xlane.xlu0 %731
        %733 = vadd.xlane.f32.xlu0 %v716
        %v734 = vpop.xlane.xlu0 %733
        %735 = vadd.xlane.f32.xlu0 %v717
        %v736 = vpop.xlane.xlu0 %735
        %737 = vadd.xlane.f32.xlu0 %v718
        %v738 = vpop.xlane.xlu0 %737
        %739 = vadd.xlane.f32.xlu0 %v719
        %v740 = vpop.xlane.xlu0 %739
        %741 = vadd.xlane.f32.xlu0 %v720
        %v742 = vpop.xlane.xlu0 %741
        %743 = vadd.xlane.f32.xlu0 %v721
        %v744 = vpop.xlane.xlu0 %743
        %745 = vadd.xlane.f32.xlu0 %v722
        %v746 = vpop.xlane.xlu0 %745
        %747 = vadd.xlane.f32.xlu0 %v723
        %v748 = vpop.xlane.xlu0 %747
        %749 = vadd.xlane.f32.xlu0 %v724
        %v750 = vpop.xlane.xlu0 %749
        %751 = vadd.xlane.f32.xlu0 %v725
        %v752 = vpop.xlane.xlu0 %751
        %753 = vadd.xlane.f32.xlu0 %v726
        %v754 = vpop.xlane.xlu0 %753
        %755 = vadd.xlane.f32.xlu0 %v727
        %v756 = vpop.xlane.xlu0 %755
        %757 = vadd.xlane.f32.xlu0 %v728
        %v758 = vpop.xlane.xlu0 %757
        %759 = vadd.xlane.f32.xlu0 %v729
        %v760 = vpop.xlane.xlu0 %759
        %761 = vadd.xlane.f32.xlu0 %v730
        %v762 = vpop.xlane.xlu0 %761
        %v763 = vmul.f32 %v684, 0.0078125
        %v764 = vmul.f32 %v686, 0.0078125
        %v765 = vmul.f32 %v688, 0.0078125
        %v766 = vmul.f32 %v690, 0.0078125
        %v767 = vmul.f32 %v692, 0.0078125
        %v768 = vmul.f32 %v694, 0.0078125
        %v769 = vmul.f32 %v696, 0.0078125
        %v770 = vmul.f32 %v698, 0.0078125
        %v771 = vmul.f32 %v700, 0.0078125
        %v772 = vmul.f32 %v702, 0.0078125
        %v773 = vmul.f32 %v704, 0.0078125
        %v774 = vmul.f32 %v706, 0.0078125
        %v775 = vmul.f32 %v708, 0.0078125
        %v776 = vmul.f32 %v710, 0.0078125
        %v777 = vmul.f32 %v712, 0.0078125
        %v778 = vmul.f32 %v714, 0.0078125
        %v779 = vmul.f32 %v732, 0.0078125
        %v780 = vmul.f32 %v734, 0.0078125
        %v781 = vmul.f32 %v736, 0.0078125
        %v782 = vmul.f32 %v738, 0.0078125
        %v783 = vmul.f32 %v740, 0.0078125
        %v784 = vmul.f32 %v742, 0.0078125
        %v785 = vmul.f32 %v744, 0.0078125
        %v786 = vmul.f32 %v746, 0.0078125
        %v787 = vmul.f32 %v748, 0.0078125
        %v788 = vmul.f32 %v750, 0.0078125
        %v789 = vmul.f32 %v752, 0.0078125
        %v790 = vmul.f32 %v754, 0.0078125
        %v791 = vmul.f32 %v756, 0.0078125
        %v792 = vmul.f32 %v758, 0.0078125
        %v793 = vmul.f32 %v760, 0.0078125
        %v794 = vmul.f32 %v762, 0.0078125
        %v795 = vmul.f32 %v763, %v763
        %v796 = vmul.f32 %v764, %v764
        %v797 = vmul.f32 %v765, %v765
        %v798 = vmul.f32 %v766, %v766
        %v799 = vmul.f32 %v767, %v767
        %v800 = vmul.f32 %v768, %v768
        %v801 = vmul.f32 %v769, %v769
        %v802 = vmul.f32 %v770, %v770
        %v803 = vmul.f32 %v771, %v771
        %v804 = vmul.f32 %v772, %v772
        %v805 = vmul.f32 %v773, %v773
        %v806 = vmul.f32 %v774, %v774
        %v807 = vmul.f32 %v775, %v775
        %v808 = vmul.f32 %v776, %v776
        %v809 = vmul.f32 %v777, %v777
        %v810 = vmul.f32 %v778, %v778
        %v811 = vsub.f32 %v779, %v795
        %v812 = vsub.f32 %v780, %v796
        %v813 = vsub.f32 %v781, %v797
        %v814 = vsub.f32 %v782, %v798
        %v815 = vsub.f32 %v783, %v799
        %v816 = vsub.f32 %v784, %v800
        %v817 = vsub.f32 %v785, %v801
        %v818 = vsub.f32 %v786, %v802
        %v819 = vsub.f32 %v787, %v803
        %v820 = vsub.f32 %v788, %v804
        %v821 = vsub.f32 %v789, %v805
        %v822 = vsub.f32 %v790, %v806
        %v823 = vsub.f32 %v791, %v807
        %v824 = vsub.f32 %v792, %v808
        %v825 = vsub.f32 %v793, %v809
        %v826 = vsub.f32 %v794, %v810
        %v827 = vmax.f32 %v811, 0.0
        %v828 = vmax.f32 %v812, 0.0
        %v829 = vmax.f32 %v813, 0.0
        %v830 = vmax.f32 %v814, 0.0
        %v831 = vmax.f32 %v815, 0.0
        %v832 = vmax.f32 %v816, 0.0
        %v833 = vmax.f32 %v817, 0.0
        %v834 = vmax.f32 %v818, 0.0
        %v835 = vmax.f32 %v819, 0.0
        %v836 = vmax.f32 %v820, 0.0
        %v837 = vmax.f32 %v821, 0.0
        %v838 = vmax.f32 %v822, 0.0
        %v839 = vmax.f32 %v823, 0.0
        %v840 = vmax.f32 %v824, 0.0
        %v841 = vmax.f32 %v825, 0.0
        %v842 = vmax.f32 %v826, 0.0
        %v843 = vadd.f32 %v827, 1e-05
        %v844 = vadd.f32 %v828, 1e-05
        %v845 = vadd.f32 %v829, 1e-05
        %v846 = vadd.f32 %v830, 1e-05
        %v847 = vadd.f32 %v831, 1e-05
        %v848 = vadd.f32 %v832, 1e-05
        %v849 = vadd.f32 %v833, 1e-05
        %v850 = vadd.f32 %v834, 1e-05
        %v851 = vadd.f32 %v835, 1e-05
        %v852 = vadd.f32 %v836, 1e-05
        %v853 = vadd.f32 %v837, 1e-05
        %v854 = vadd.f32 %v838, 1e-05
        %v855 = vadd.f32 %v839, 1e-05
        %v856 = vadd.f32 %v840, 1e-05
        %v857 = vadd.f32 %v841, 1e-05
        %v858 = vadd.f32 %v842, 1e-05
        %v859 = vrsqrt.pop %v843
        %v860 = vrsqrt.pop %v844
        %v861 = vrsqrt.pop %v845
        %v862 = vrsqrt.pop %v846
        %v863 = vrsqrt.pop %v847
        %v864 = vrsqrt.pop %v848
        %v865 = vrsqrt.pop %v849
        %v866 = vrsqrt.pop %v850
        %v867 = vrsqrt.pop %v851
        %v868 = vrsqrt.pop %v852
        %v869 = vrsqrt.pop %v853
        %v870 = vrsqrt.pop %v854
        %v871 = vrsqrt.pop %v855
        %v872 = vrsqrt.pop %v856
        %v873 = vrsqrt.pop %v857
        %v874 = vrsqrt.pop %v858
        %v875 = vsub.f32 %v667, %v763
        %v876 = vsub.f32 %v668, %v764
        %v877 = vsub.f32 %v669, %v765
        %v878 = vsub.f32 %v670, %v766
        %v879 = vsub.f32 %v671, %v767
        %v880 = vsub.f32 %v672, %v768
        %v881 = vsub.f32 %v673, %v769
        %v882 = vsub.f32 %v674, %v770
        %v883 = vsub.f32 %v675, %v771
        %v884 = vsub.f32 %v676, %v772
        %v885 = vsub.f32 %v677, %v773
        %v886 = vsub.f32 %v678, %v774
        %v887 = vsub.f32 %v679, %v775
        %v888 = vsub.f32 %v680, %v776
        %v889 = vsub.f32 %v681, %v777
        %v890 = vsub.f32 %v682, %v778
        %v891 = vmul.f32 %v875, %v859
        %v892 = vmul.f32 %v876, %v860
        %v893 = vmul.f32 %v877, %v861
        %v894 = vmul.f32 %v878, %v862
        %v895 = vmul.f32 %v879, %v863
        %v896 = vmul.f32 %v880, %v864
        %v897 = vmul.f32 %v881, %v865
        %v898 = vmul.f32 %v882, %v866
        %v899 = vmul.f32 %v883, %v867
        %v900 = vmul.f32 %v884, %v868
        %v901 = vmul.f32 %v885, %v869
        %v902 = vmul.f32 %v886, %v870
        %v903 = vmul.f32 %v887, %v871
        %v904 = vmul.f32 %v888, %v872
        %v905 = vmul.f32 %v889, %v873
        %v906 = vmul.f32 %v890, %v874
        %v907 = vlaneseq
        %v908 = vshrl.u32 %v907, 7
        %v909 = vsub.s32 0, %v908
        %v910 = vrot.slane %v366, %v909
        %v911 = vmul.f32 %v891, %v910
        %v912 = vmul.f32 %v892, %v910
        %v913 = vmul.f32 %v893, %v910
        %v914 = vmul.f32 %v894, %v910
        %v915 = vmul.f32 %v895, %v910
        %v916 = vmul.f32 %v896, %v910
        %v917 = vmul.f32 %v897, %v910
        %v918 = vmul.f32 %v898, %v910
        %v919 = vmul.f32 %v899, %v910
        %v920 = vmul.f32 %v900, %v910
        %v921 = vmul.f32 %v901, %v910
        %v922 = vmul.f32 %v902, %v910
        %v923 = vmul.f32 %v903, %v910
        %v924 = vmul.f32 %v904, %v910
        %v925 = vmul.f32 %v905, %v910
        %v926 = vmul.f32 %v906, %v910
        %v927 = vlaneseq
        %v928 = vshrl.u32 %v927, 7
        %v929 = vsub.s32 0, %v928
        %v930 = vrot.slane %v367, %v929
        %v931 = vadd.f32 %v911, %v930
        %v932 = vadd.f32 %v912, %v930
        %v933 = vadd.f32 %v913, %v930
        %v934 = vadd.f32 %v914, %v930
        %v935 = vadd.f32 %v915, %v930
        %v936 = vadd.f32 %v916, %v930
        %v937 = vadd.f32 %v917, %v930
        %v938 = vadd.f32 %v918, %v930
        %v939 = vadd.f32 %v919, %v930
        %v940 = vadd.f32 %v920, %v930
        %v941 = vadd.f32 %v921, %v930
        %v942 = vadd.f32 %v922, %v930
        %v943 = vadd.f32 %v923, %v930
        %v944 = vadd.f32 %v924, %v930
        %v945 = vadd.f32 %v925, %v930
        %v946 = vadd.f32 %v926, %v930
        %v947 = vmin.f32 %v931, 20.0
        %v948 = vmin.f32 %v932, 20.0
        %v949 = vmin.f32 %v933, 20.0
        %v950 = vmin.f32 %v934, 20.0
        %v951 = vmin.f32 %v935, 20.0
        %v952 = vmin.f32 %v936, 20.0
        %v953 = vmin.f32 %v937, 20.0
        %v954 = vmin.f32 %v938, 20.0
        %v955 = vmin.f32 %v939, 20.0
        %v956 = vmin.f32 %v940, 20.0
        %v957 = vmin.f32 %v941, 20.0
        %v958 = vmin.f32 %v942, 20.0
        %v959 = vmin.f32 %v943, 20.0
        %v960 = vmin.f32 %v944, 20.0
        %v961 = vmin.f32 %v945, 20.0
        %v962 = vmin.f32 %v946, 20.0
        %v963 = vmul.f32 %v947, 1.442695
        %v964 = vpow.pop %v963
        %v965 = vmul.f32 %v948, 1.442695
        %v966 = vpow.pop %v965
        %v967 = vmul.f32 %v949, 1.442695
        %v968 = vpow.pop %v967
        %v969 = vmul.f32 %v950, 1.442695
        %v970 = vpow.pop %v969
        %v971 = vmul.f32 %v951, 1.442695
        %v972 = vpow.pop %v971
        %v973 = vmul.f32 %v952, 1.442695
        %v974 = vpow.pop %v973
        %v975 = vmul.f32 %v953, 1.442695
        %v976 = vpow.pop %v975
        %v977 = vmul.f32 %v954, 1.442695
        %v978 = vpow.pop %v977
        %v979 = vmul.f32 %v955, 1.442695
        %v980 = vpow.pop %v979
        %v981 = vmul.f32 %v956, 1.442695
        %v982 = vpow.pop %v981
        %v983 = vmul.f32 %v957, 1.442695
        %v984 = vpow.pop %v983
        %v985 = vmul.f32 %v958, 1.442695
        %v986 = vpow.pop %v985
        %v987 = vmul.f32 %v959, 1.442695
        %v988 = vpow.pop %v987
        %v989 = vmul.f32 %v960, 1.442695
        %v990 = vpow.pop %v989
        %v991 = vmul.f32 %v961, 1.442695
        %v992 = vpow.pop %v991
        %v993 = vmul.f32 %v962, 1.442695
        %v994 = vpow.pop %v993
        %v995 = vadd.f32 %v964, 2.0
        %v996 = vadd.f32 %v966, 2.0
        %v997 = vadd.f32 %v968, 2.0
        %v998 = vadd.f32 %v970, 2.0
        %v999 = vadd.f32 %v972, 2.0
        %v1000 = vadd.f32 %v974, 2.0
        %v1001 = vadd.f32 %v976, 2.0
        %v1002 = vadd.f32 %v978, 2.0
        %v1003 = vadd.f32 %v980, 2.0
        %v1004 = vadd.f32 %v982, 2.0
        %v1005 = vadd.f32 %v984, 2.0
        %v1006 = vadd.f32 %v986, 2.0
        %v1007 = vadd.f32 %v988, 2.0
        %v1008 = vadd.f32 %v990, 2.0
        %v1009 = vadd.f32 %v992, 2.0
        %v1010 = vadd.f32 %v994, 2.0
        %v1011 = vmul.f32 %v964, %v995
        %v1012 = vmul.f32 %v966, %v996
        %v1013 = vmul.f32 %v968, %v997
        %v1014 = vmul.f32 %v970, %v998
        %v1015 = vmul.f32 %v972, %v999
        %v1016 = vmul.f32 %v974, %v1000
        %v1017 = vmul.f32 %v976, %v1001
        %v1018 = vmul.f32 %v978, %v1002
        %v1019 = vmul.f32 %v980, %v1003
        %v1020 = vmul.f32 %v982, %v1004
        %v1021 = vmul.f32 %v984, %v1005
        %v1022 = vmul.f32 %v986, %v1006
        %v1023 = vmul.f32 %v988, %v1007
        %v1024 = vmul.f32 %v990, %v1008
        %v1025 = vmul.f32 %v992, %v1009
        %v1026 = vmul.f32 %v994, %v1010
        %v1027 = vmul.f32 %v931, %v1011
        %v1028 = vmul.f32 %v932, %v1012
        %v1029 = vmul.f32 %v933, %v1013
        %v1030 = vmul.f32 %v934, %v1014
        %v1031 = vmul.f32 %v935, %v1015
        %v1032 = vmul.f32 %v936, %v1016
        %v1033 = vmul.f32 %v937, %v1017
        %v1034 = vmul.f32 %v938, %v1018
        %v1035 = vmul.f32 %v939, %v1019
        %v1036 = vmul.f32 %v940, %v1020
        %v1037 = vmul.f32 %v941, %v1021
        %v1038 = vmul.f32 %v942, %v1022
        %v1039 = vmul.f32 %v943, %v1023
        %v1040 = vmul.f32 %v944, %v1024
        %v1041 = vmul.f32 %v945, %v1025
        %v1042 = vmul.f32 %v946, %v1026
        %v1043 = vadd.f32 %v1011, 2.0
        %v1044 = vadd.f32 %v1012, 2.0
        %v1045 = vadd.f32 %v1013, 2.0
        %v1046 = vadd.f32 %v1014, 2.0
        %v1047 = vadd.f32 %v1015, 2.0
        %v1048 = vadd.f32 %v1016, 2.0
        %v1049 = vadd.f32 %v1017, 2.0
        %v1050 = vadd.f32 %v1018, 2.0
        %v1051 = vadd.f32 %v1019, 2.0
        %v1052 = vadd.f32 %v1020, 2.0
        %v1053 = vadd.f32 %v1021, 2.0
        %v1054 = vadd.f32 %v1022, 2.0
        %v1055 = vadd.f32 %v1023, 2.0
        %v1056 = vadd.f32 %v1024, 2.0
        %v1057 = vadd.f32 %v1025, 2.0
        %v1058 = vadd.f32 %v1026, 2.0
        %v1059 = vrcp.pop %v1043
        %v1060 = vrcp.pop %v1044
        %v1061 = vrcp.pop %v1045
        %v1062 = vrcp.pop %v1046
        %v1063 = vrcp.pop %v1047
        %v1064 = vrcp.pop %v1048
        %v1065 = vrcp.pop %v1049
        %v1066 = vrcp.pop %v1050
        %v1067 = vrcp.pop %v1051
        %v1068 = vrcp.pop %v1052
        %v1069 = vrcp.pop %v1053
        %v1070 = vrcp.pop %v1054
        %v1071 = vrcp.pop %v1055
        %v1072 = vrcp.pop %v1056
        %v1073 = vrcp.pop %v1057
        %v1074 = vrcp.pop %v1058
        %v1075 = vmul.f32 %v1027, %v1059
        %v1076 = vmul.f32 %v1028, %v1060
        %v1077 = vmul.f32 %v1029, %v1061
        %v1078 = vmul.f32 %v1030, %v1062
        %v1079 = vmul.f32 %v1031, %v1063
        %v1080 = vmul.f32 %v1032, %v1064
        %v1081 = vmul.f32 %v1033, %v1065
        %v1082 = vmul.f32 %v1034, %v1066
        %v1083 = vmul.f32 %v1035, %v1067
        %v1084 = vmul.f32 %v1036, %v1068
        %v1085 = vmul.f32 %v1037, %v1069
        %v1086 = vmul.f32 %v1038, %v1070
        %v1087 = vmul.f32 %v1039, %v1071
        %v1088 = vmul.f32 %v1040, %v1072
        %v1089 = vmul.f32 %v1041, %v1073
        %v1090 = vmul.f32 %v1042, %v1074
        %v1091 = vpack.c.bf16 %v1076, %v1075
        %v1092 = vpack.c.bf16 %v1078, %v1077
        %v1093 = vpack.c.bf16 %v1080, %v1079
        %v1094 = vpack.c.bf16 %v1082, %v1081
        %v1095 = vpack.c.bf16 %v1084, %v1083
        %v1096 = vpack.c.bf16 %v1086, %v1085
        %v1097 = vpack.c.bf16 %v1088, %v1087
        %v1098 = vpack.c.bf16 %v1090, %v1089
        %v1099 = vld [vmem:[#allocation3] sm:$0xf]
        %v1100 = vld [vmem:[#allocation3 + $0x4] sm:$0xf]
        %v1101 = vld [vmem:[#allocation3 + $0x8] sm:$0xf]
        %v1102 = vld [vmem:[#allocation3 + $0xc] sm:$0xf]
        %v1103 = vld [vmem:[#allocation3 + $0x10] sm:$0xf]
        %v1104 = vld [vmem:[#allocation3 + $0x14] sm:$0xf]
        %v1105 = vld [vmem:[#allocation3 + $0x18] sm:$0xf]
        %v1106 = vld [vmem:[#allocation3 + $0x1c] sm:$0xf]
        %v1107 = vld [vmem:[#allocation3 + $0x20] sm:$0xf]
        %v1108 = vld [vmem:[#allocation3 + $0x24] sm:$0xf]
        %v1109 = vld [vmem:[#allocation3 + $0x28] sm:$0xf]
        %v1110 = vld [vmem:[#allocation3 + $0x2c] sm:$0xf]
        %v1111 = vld [vmem:[#allocation3 + $0x30] sm:$0xf]
        %v1112 = vld [vmem:[#allocation3 + $0x34] sm:$0xf]
        %v1113 = vld [vmem:[#allocation3 + $0x38] sm:$0xf]
        %v1114 = vld [vmem:[#allocation3 + $0x3c] sm:$0xf]
        %v1115 = vlaneseq
        %v1116 = vshrl.u32 %v1115, 7
        %v1117 = vsub.s32 0, %v1116
        %v1118 = vrot.slane %v368, %v1117
        %v1135 = vunpack.c.l.b16 %v1099
        %v1136 = vunpack.c.l.b16 %v1100
        %v1137 = vunpack.c.l.b16 %v1101
        %v1138 = vunpack.c.l.b16 %v1102
        %v1139 = vunpack.c.l.b16 %v1103
        %v1140 = vunpack.c.l.b16 %v1104
        %v1141 = vunpack.c.l.b16 %v1105
        %v1142 = vunpack.c.l.b16 %v1106
        %v1143 = vunpack.c.l.b16 %v1107
        %v1144 = vunpack.c.l.b16 %v1108
        %v1145 = vunpack.c.l.b16 %v1109
        %v1146 = vunpack.c.l.b16 %v1110
        %v1147 = vunpack.c.l.b16 %v1111
        %v1148 = vunpack.c.l.b16 %v1112
        %v1149 = vunpack.c.l.b16 %v1113
        %v1150 = vunpack.c.l.b16 %v1114
        %v1151 = vpack.c.b16 %v1136, %v1135
        %v1152 = vpack.c.b16 %v1138, %v1137
        %v1153 = vpack.c.b16 %v1140, %v1139
        %v1154 = vpack.c.b16 %v1142, %v1141
        %v1155 = vpack.c.b16 %v1144, %v1143
        %v1156 = vpack.c.b16 %v1146, %v1145
        %v1157 = vpack.c.b16 %v1148, %v1147
        %v1158 = vpack.c.b16 %v1150, %v1149
        %1167 = vmatprep.subr.bf16.mxu0 0
        %1168 = vmatpush1.bf16.msra.mxu0 %v1151
        %1169 = vmatprep.subr.bf16.mxu0 0
        %1170 = vmatpush1.bf16.msra.mxu0 %v1152
        %1171 = vmatprep.subr.bf16.mxu0 0
        %1172 = vmatpush1.bf16.msra.mxu0 %v1153
        %1173 = vmatprep.subr.bf16.mxu0 0
        %1174 = vmatpush1.bf16.msra.mxu0 %v1154
        %1175 = vmatprep.subr.bf16.mxu0 0
        %1176 = vmatpush1.bf16.msra.mxu0 %v1155
        %1177 = vmatprep.subr.bf16.mxu0 0
        %1178 = vmatpush1.bf16.msra.mxu0 %v1156
        %1179 = vmatprep.subr.bf16.mxu0 0
        %1180 = vmatpush1.bf16.msra.mxu0 %v1157
        %1181 = vmatprep.subr.bf16.mxu0 0
        %1182 = vmatpush1.bf16.msra.mxu0 %v1158
        %1183 = vmatprep.subr.bf16.mxu0 0
        %1184 = vmatpush1.bf16.msra.mxu0 0
        %1185 = vmatprep.subr.bf16.mxu0 0
        %1186 = vmatpush1.bf16.msra.mxu0 0
        %1187 = vmatprep.subr.bf16.mxu0 0
        %1188 = vmatpush1.bf16.msra.mxu0 0
        %1189 = vmatprep.subr.bf16.mxu0 0
        %1190 = vmatpush1.bf16.msra.mxu0 0
        %1191 = vmatprep.subr.bf16.mxu0 0
        %1192 = vmatpush1.bf16.msra.mxu0 0
        %1193 = vmatprep.subr.bf16.mxu0 0
        %1194 = vmatpush1.bf16.msra.mxu0 0
        %1195 = vmatprep.subr.bf16.mxu0 0
        %1196 = vmatpush1.bf16.msra.mxu0 0
        %1197 = vmatprep.subr.bf16.mxu0 0
        %1198 = vmatpush1.bf16.msra.mxu0 0
        %1199 = vmatprep.mubr.bf16.mxu0 0
        %1200 = vmatmul.mubr.bf16.gmra.mrb[0].mxu0 %v1091
        %v1201 = vpop.f32.mrb[0].mxu0
        %v1202 = vadd.f32 %v1118, %v1201
        %v1203 = vpop.f32.mrb[0].mxu0
        %v1204 = vpop.f32.mrb[0].mxu0
        %v1205 = vadd.f32 %v1118, %v1204
        %v1206 = vpop.f32.mrb[0].mxu0
        %1207 = vmatprep.mubr.bf16.mxu0 0
        %1208 = vmatmul.mubr.bf16.gmra.mrb[0].mxu0 %v1092
        %v1209 = vpop.f32.mrb[0].mxu0
        %v1210 = vadd.f32 %v1118, %v1209
        %v1211 = vpop.f32.mrb[0].mxu0
        %v1212 = vpop.f32.mrb[0].mxu0
        %v1213 = vadd.f32 %v1118, %v1212
        %v1214 = vpop.f32.mrb[0].mxu0
        %1215 = vmatprep.mubr.bf16.mxu0 0
        %1216 = vmatmul.mubr.bf16.gmra.mrb[0].mxu0 %v1093
        %v1217 = vpop.f32.mrb[0].mxu0
        %v1218 = vadd.f32 %v1118, %v1217
        %v1219 = vpop.f32.mrb[0].mxu0
        %v1220 = vpop.f32.mrb[0].mxu0
        %v1221 = vadd.f32 %v1118, %v1220
        %v1222 = vpop.f32.mrb[0].mxu0
        %1223 = vmatprep.mubr.bf16.mxu0 0
        %1224 = vmatmul.mubr.bf16.gmra.mrb[0].mxu0 %v1094
        %v1225 = vpop.f32.mrb[0].mxu0
        %v1226 = vadd.f32 %v1118, %v1225
        %v1227 = vpop.f32.mrb[0].mxu0
        %v1228 = vpop.f32.mrb[0].mxu0
        %v1229 = vadd.f32 %v1118, %v1228
        %v1230 = vpop.f32.mrb[0].mxu0
        %1231 = vmatprep.mubr.bf16.mxu0 0
        %1232 = vmatmul.mubr.bf16.gmra.mrb[0].mxu0 %v1095
        %v1233 = vpop.f32.mrb[0].mxu0
        %v1234 = vadd.f32 %v1118, %v1233
        %v1235 = vpop.f32.mrb[0].mxu0
        %v1236 = vpop.f32.mrb[0].mxu0
        %v1237 = vadd.f32 %v1118, %v1236
        %v1238 = vpop.f32.mrb[0].mxu0
        %1239 = vmatprep.mubr.bf16.mxu0 0
        %1240 = vmatmul.mubr.bf16.gmra.mrb[0].mxu0 %v1096
        %v1241 = vpop.f32.mrb[0].mxu0
        %v1242 = vadd.f32 %v1118, %v1241
        %v1243 = vpop.f32.mrb[0].mxu0
        %v1244 = vpop.f32.mrb[0].mxu0
        %v1245 = vadd.f32 %v1118, %v1244
        %v1246 = vpop.f32.mrb[0].mxu0
        %1247 = vmatprep.mubr.bf16.mxu0 0
        %1248 = vmatmul.mubr.bf16.gmra.mrb[0].mxu0 %v1097
        %v1249 = vpop.f32.mrb[0].mxu0
        %v1250 = vadd.f32 %v1118, %v1249
        %v1251 = vpop.f32.mrb[0].mxu0
        %v1252 = vpop.f32.mrb[0].mxu0
        %v1253 = vadd.f32 %v1118, %v1252
        %v1254 = vpop.f32.mrb[0].mxu0
        %1255 = vmatprep.mubr.bf16.mxu0 0
        %1256 = vmatmul.mubr.bf16.gmra.mrb[0].mxu0 %v1098
        %v1257 = vpop.f32.mrb[0].mxu0
        %v1258 = vadd.f32 %v1118, %v1257
        %v1259 = vpop.f32.mrb[0].mxu0
        %v1260 = vpop.f32.mrb[0].mxu0
        %v1261 = vadd.f32 %v1118, %v1260
        %v1262 = vpop.f32.mrb[0].mxu0
        %1263 = vdwg.mxu0
        %1264 = vadd.xlane.f32.xlu0 %v1202
        %v1265 = vpop.xlane.xlu0 %1264
        %1266 = vadd.xlane.f32.xlu0 %v1205
        %v1267 = vpop.xlane.xlu0 %1266
        %1268 = vadd.xlane.f32.xlu0 %v1210
        %v1269 = vpop.xlane.xlu0 %1268
        %1270 = vadd.xlane.f32.xlu0 %v1213
        %v1271 = vpop.xlane.xlu0 %1270
        %1272 = vadd.xlane.f32.xlu0 %v1218
        %v1273 = vpop.xlane.xlu0 %1272
        %1274 = vadd.xlane.f32.xlu0 %v1221
        %v1275 = vpop.xlane.xlu0 %1274
        %1276 = vadd.xlane.f32.xlu0 %v1226
        %v1277 = vpop.xlane.xlu0 %1276
        %1278 = vadd.xlane.f32.xlu0 %v1229
        %v1279 = vpop.xlane.xlu0 %1278
        %1280 = vadd.xlane.f32.xlu0 %v1234
        %v1281 = vpop.xlane.xlu0 %1280
        %1282 = vadd.xlane.f32.xlu0 %v1237
        %v1283 = vpop.xlane.xlu0 %1282
        %1284 = vadd.xlane.f32.xlu0 %v1242
        %v1285 = vpop.xlane.xlu0 %1284
        %1286 = vadd.xlane.f32.xlu0 %v1245
        %v1287 = vpop.xlane.xlu0 %1286
        %1288 = vadd.xlane.f32.xlu0 %v1250
        %v1289 = vpop.xlane.xlu0 %1288
        %1290 = vadd.xlane.f32.xlu0 %v1253
        %v1291 = vpop.xlane.xlu0 %1290
        %1292 = vadd.xlane.f32.xlu0 %v1258
        %v1293 = vpop.xlane.xlu0 %1292
        %1294 = vadd.xlane.f32.xlu0 %v1261
        %v1295 = vpop.xlane.xlu0 %1294
        %v1296 = vmul.f32 %v1202, %v1202
        %v1297 = vmul.f32 %v1205, %v1205
        %v1298 = vmul.f32 %v1210, %v1210
        %v1299 = vmul.f32 %v1213, %v1213
        %v1300 = vmul.f32 %v1218, %v1218
        %v1301 = vmul.f32 %v1221, %v1221
        %v1302 = vmul.f32 %v1226, %v1226
        %v1303 = vmul.f32 %v1229, %v1229
        %v1304 = vmul.f32 %v1234, %v1234
        %v1305 = vmul.f32 %v1237, %v1237
        %v1306 = vmul.f32 %v1242, %v1242
        %v1307 = vmul.f32 %v1245, %v1245
        %v1308 = vmul.f32 %v1250, %v1250
        %v1309 = vmul.f32 %v1253, %v1253
        %v1310 = vmul.f32 %v1258, %v1258
        %v1311 = vmul.f32 %v1261, %v1261
        %1312 = vadd.xlane.f32.xlu0 %v1296
        %v1313 = vpop.xlane.xlu0 %1312
        %1314 = vadd.xlane.f32.xlu0 %v1297
        %v1315 = vpop.xlane.xlu0 %1314
        %1316 = vadd.xlane.f32.xlu0 %v1298
        %v1317 = vpop.xlane.xlu0 %1316
        %1318 = vadd.xlane.f32.xlu0 %v1299
        %v1319 = vpop.xlane.xlu0 %1318
        %1320 = vadd.xlane.f32.xlu0 %v1300
        %v1321 = vpop.xlane.xlu0 %1320
        %1322 = vadd.xlane.f32.xlu0 %v1301
        %v1323 = vpop.xlane.xlu0 %1322
        %1324 = vadd.xlane.f32.xlu0 %v1302
        %v1325 = vpop.xlane.xlu0 %1324
        %1326 = vadd.xlane.f32.xlu0 %v1303
        %v1327 = vpop.xlane.xlu0 %1326
        %1328 = vadd.xlane.f32.xlu0 %v1304
        %v1329 = vpop.xlane.xlu0 %1328
        %1330 = vadd.xlane.f32.xlu0 %v1305
        %v1331 = vpop.xlane.xlu0 %1330
        %1332 = vadd.xlane.f32.xlu0 %v1306
        %v1333 = vpop.xlane.xlu0 %1332
        %1334 = vadd.xlane.f32.xlu0 %v1307
        %v1335 = vpop.xlane.xlu0 %1334
        %1336 = vadd.xlane.f32.xlu0 %v1308
        %v1337 = vpop.xlane.xlu0 %1336
        %1338 = vadd.xlane.f32.xlu0 %v1309
        %v1339 = vpop.xlane.xlu0 %1338
        %1340 = vadd.xlane.f32.xlu0 %v1310
        %v1341 = vpop.xlane.xlu0 %1340
        %1342 = vadd.xlane.f32.xlu0 %v1311
        %v1343 = vpop.xlane.xlu0 %1342
        %v1344 = vmul.f32 %v1265, 0.0078125
        %v1345 = vmul.f32 %v1267, 0.0078125
        %v1346 = vmul.f32 %v1269, 0.0078125
        %v1347 = vmul.f32 %v1271, 0.0078125
        %v1348 = vmul.f32 %v1273, 0.0078125
        %v1349 = vmul.f32 %v1275, 0.0078125
        %v1350 = vmul.f32 %v1277, 0.0078125
        %v1351 = vmul.f32 %v1279, 0.0078125
        %v1352 = vmul.f32 %v1281, 0.0078125
        %v1353 = vmul.f32 %v1283, 0.0078125
        %v1354 = vmul.f32 %v1285, 0.0078125
        %v1355 = vmul.f32 %v1287, 0.0078125
        %v1356 = vmul.f32 %v1289, 0.0078125
        %v1357 = vmul.f32 %v1291, 0.0078125
        %v1358 = vmul.f32 %v1293, 0.0078125
        %v1359 = vmul.f32 %v1295, 0.0078125
        %v1360 = vmul.f32 %v1313, 0.0078125
        %v1361 = vmul.f32 %v1315, 0.0078125
        %v1362 = vmul.f32 %v1317, 0.0078125
        %v1363 = vmul.f32 %v1319, 0.0078125
        %v1364 = vmul.f32 %v1321, 0.0078125
        %v1365 = vmul.f32 %v1323, 0.0078125
        %v1366 = vmul.f32 %v1325, 0.0078125
        %v1367 = vmul.f32 %v1327, 0.0078125
        %v1368 = vmul.f32 %v1329, 0.0078125
        %v1369 = vmul.f32 %v1331, 0.0078125
        %v1370 = vmul.f32 %v1333, 0.0078125
        %v1371 = vmul.f32 %v1335, 0.0078125
        %v1372 = vmul.f32 %v1337, 0.0078125
        %v1373 = vmul.f32 %v1339, 0.0078125
        %v1374 = vmul.f32 %v1341, 0.0078125
        %v1375 = vmul.f32 %v1343, 0.0078125
        %v1376 = vmul.f32 %v1344, %v1344
        %v1377 = vmul.f32 %v1345, %v1345
        %v1378 = vmul.f32 %v1346, %v1346
        %v1379 = vmul.f32 %v1347, %v1347
        %v1380 = vmul.f32 %v1348, %v1348
        %v1381 = vmul.f32 %v1349, %v1349
        %v1382 = vmul.f32 %v1350, %v1350
        %v1383 = vmul.f32 %v1351, %v1351
        %v1384 = vmul.f32 %v1352, %v1352
        %v1385 = vmul.f32 %v1353, %v1353
        %v1386 = vmul.f32 %v1354, %v1354
        %v1387 = vmul.f32 %v1355, %v1355
        %v1388 = vmul.f32 %v1356, %v1356
        %v1389 = vmul.f32 %v1357, %v1357
        %v1390 = vmul.f32 %v1358, %v1358
        %v1391 = vmul.f32 %v1359, %v1359
        %v1392 = vsub.f32 %v1360, %v1376
        %v1393 = vsub.f32 %v1361, %v1377
        %v1394 = vsub.f32 %v1362, %v1378
        %v1395 = vsub.f32 %v1363, %v1379
        %v1396 = vsub.f32 %v1364, %v1380
        %v1397 = vsub.f32 %v1365, %v1381
        %v1398 = vsub.f32 %v1366, %v1382
        %v1399 = vsub.f32 %v1367, %v1383
        %v1400 = vsub.f32 %v1368, %v1384
        %v1401 = vsub.f32 %v1369, %v1385
        %v1402 = vsub.f32 %v1370, %v1386
        %v1403 = vsub.f32 %v1371, %v1387
        %v1404 = vsub.f32 %v1372, %v1388
        %v1405 = vsub.f32 %v1373, %v1389
        %v1406 = vsub.f32 %v1374, %v1390
        %v1407 = vsub.f32 %v1375, %v1391
        %v1408 = vmax.f32 %v1392, 0.0
        %v1409 = vmax.f32 %v1393, 0.0
        %v1410 = vmax.f32 %v1394, 0.0
        %v1411 = vmax.f32 %v1395, 0.0
        %v1412 = vmax.f32 %v1396, 0.0
        %v1413 = vmax.f32 %v1397, 0.0
        %v1414 = vmax.f32 %v1398, 0.0
        %v1415 = vmax.f32 %v1399, 0.0
        %v1416 = vmax.f32 %v1400, 0.0
        %v1417 = vmax.f32 %v1401, 0.0
        %v1418 = vmax.f32 %v1402, 0.0
        %v1419 = vmax.f32 %v1403, 0.0
        %v1420 = vmax.f32 %v1404, 0.0
        %v1421 = vmax.f32 %v1405, 0.0
        %v1422 = vmax.f32 %v1406, 0.0
        %v1423 = vmax.f32 %v1407, 0.0
        %v1424 = vadd.f32 %v1408, 1e-05
        %v1425 = vadd.f32 %v1409, 1e-05
        %v1426 = vadd.f32 %v1410, 1e-05
        %v1427 = vadd.f32 %v1411, 1e-05
        %v1428 = vadd.f32 %v1412, 1e-05
        %v1429 = vadd.f32 %v1413, 1e-05
        %v1430 = vadd.f32 %v1414, 1e-05
        %v1431 = vadd.f32 %v1415, 1e-05
        %v1432 = vadd.f32 %v1416, 1e-05
        %v1433 = vadd.f32 %v1417, 1e-05
        %v1434 = vadd.f32 %v1418, 1e-05
        %v1435 = vadd.f32 %v1419, 1e-05
        %v1436 = vadd.f32 %v1420, 1e-05
        %v1437 = vadd.f32 %v1421, 1e-05
        %v1438 = vadd.f32 %v1422, 1e-05
        %v1439 = vadd.f32 %v1423, 1e-05
        %v1440 = vrsqrt.pop %v1424
        %v1441 = vrsqrt.pop %v1425
        %v1442 = vrsqrt.pop %v1426
        %v1443 = vrsqrt.pop %v1427
        %v1444 = vrsqrt.pop %v1428
        %v1445 = vrsqrt.pop %v1429
        %v1446 = vrsqrt.pop %v1430
        %v1447 = vrsqrt.pop %v1431
        %v1448 = vrsqrt.pop %v1432
        %v1449 = vrsqrt.pop %v1433
        %v1450 = vrsqrt.pop %v1434
        %v1451 = vrsqrt.pop %v1435
        %v1452 = vrsqrt.pop %v1436
        %v1453 = vrsqrt.pop %v1437
        %v1454 = vrsqrt.pop %v1438
        %v1455 = vrsqrt.pop %v1439
        %v1456 = vsub.f32 %v1202, %v1344
        %v1457 = vsub.f32 %v1205, %v1345
        %v1458 = vsub.f32 %v1210, %v1346
        %v1459 = vsub.f32 %v1213, %v1347
        %v1460 = vsub.f32 %v1218, %v1348
        %v1461 = vsub.f32 %v1221, %v1349
        %v1462 = vsub.f32 %v1226, %v1350
        %v1463 = vsub.f32 %v1229, %v1351
        %v1464 = vsub.f32 %v1234, %v1352
        %v1465 = vsub.f32 %v1237, %v1353
        %v1466 = vsub.f32 %v1242, %v1354
        %v1467 = vsub.f32 %v1245, %v1355
        %v1468 = vsub.f32 %v1250, %v1356
        %v1469 = vsub.f32 %v1253, %v1357
        %v1470 = vsub.f32 %v1258, %v1358
        %v1471 = vsub.f32 %v1261, %v1359
        %v1472 = vmul.f32 %v1456, %v1440
        %v1473 = vmul.f32 %v1457, %v1441
        %v1474 = vmul.f32 %v1458, %v1442
        %v1475 = vmul.f32 %v1459, %v1443
        %v1476 = vmul.f32 %v1460, %v1444
        %v1477 = vmul.f32 %v1461, %v1445
        %v1478 = vmul.f32 %v1462, %v1446
        %v1479 = vmul.f32 %v1463, %v1447
        %v1480 = vmul.f32 %v1464, %v1448
        %v1481 = vmul.f32 %v1465, %v1449
        %v1482 = vmul.f32 %v1466, %v1450
        %v1483 = vmul.f32 %v1467, %v1451
        %v1484 = vmul.f32 %v1468, %v1452
        %v1485 = vmul.f32 %v1469, %v1453
        %v1486 = vmul.f32 %v1470, %v1454
        %v1487 = vmul.f32 %v1471, %v1455
        %v1488 = vlaneseq
        %v1489 = vshrl.u32 %v1488, 7
        %v1490 = vsub.s32 0, %v1489
        %v1491 = vrot.slane %v369, %v1490
        %v1492 = vmul.f32 %v1472, %v1491
        %v1493 = vmul.f32 %v1473, %v1491
        %v1494 = vmul.f32 %v1474, %v1491
        %v1495 = vmul.f32 %v1475, %v1491
        %v1496 = vmul.f32 %v1476, %v1491
        %v1497 = vmul.f32 %v1477, %v1491
        %v1498 = vmul.f32 %v1478, %v1491
        %v1499 = vmul.f32 %v1479, %v1491
        %v1500 = vmul.f32 %v1480, %v1491
        %v1501 = vmul.f32 %v1481, %v1491
        %v1502 = vmul.f32 %v1482, %v1491
        %v1503 = vmul.f32 %v1483, %v1491
        %v1504 = vmul.f32 %v1484, %v1491
        %v1505 = vmul.f32 %v1485, %v1491
        %v1506 = vmul.f32 %v1486, %v1491
        %v1507 = vmul.f32 %v1487, %v1491
        %v1508 = vlaneseq
        %v1509 = vshrl.u32 %v1508, 7
        %v1510 = vsub.s32 0, %v1509
        %v1511 = vrot.slane %v370, %v1510
        %v1512 = vadd.f32 %v1492, %v1511
        %v1513 = vadd.f32 %v1493, %v1511
        %v1514 = vadd.f32 %v1494, %v1511
        %v1515 = vadd.f32 %v1495, %v1511
        %v1516 = vadd.f32 %v1496, %v1511
        %v1517 = vadd.f32 %v1497, %v1511
        %v1518 = vadd.f32 %v1498, %v1511
        %v1519 = vadd.f32 %v1499, %v1511
        %v1520 = vadd.f32 %v1500, %v1511
        %v1521 = vadd.f32 %v1501, %v1511
        %v1522 = vadd.f32 %v1502, %v1511
        %v1523 = vadd.f32 %v1503, %v1511
        %v1524 = vadd.f32 %v1504, %v1511
        %v1525 = vadd.f32 %v1505, %v1511
        %v1526 = vadd.f32 %v1506, %v1511
        %v1527 = vadd.f32 %v1507, %v1511
        %v1528 = vmin.f32 %v1512, 20.0
        %v1529 = vmin.f32 %v1513, 20.0
        %v1530 = vmin.f32 %v1514, 20.0
        %v1531 = vmin.f32 %v1515, 20.0
        %v1532 = vmin.f32 %v1516, 20.0
        %v1533 = vmin.f32 %v1517, 20.0
        %v1534 = vmin.f32 %v1518, 20.0
        %v1535 = vmin.f32 %v1519, 20.0
        %v1536 = vmin.f32 %v1520, 20.0
        %v1537 = vmin.f32 %v1521, 20.0
        %v1538 = vmin.f32 %v1522, 20.0
        %v1539 = vmin.f32 %v1523, 20.0
        %v1540 = vmin.f32 %v1524, 20.0
        %v1541 = vmin.f32 %v1525, 20.0
        %v1542 = vmin.f32 %v1526, 20.0
        %v1543 = vmin.f32 %v1527, 20.0
        %v1544 = vmul.f32 %v1528, 1.442695
        %v1545 = vpow.pop %v1544
        %v1546 = vmul.f32 %v1529, 1.442695
        %v1547 = vpow.pop %v1546
        %v1548 = vmul.f32 %v1530, 1.442695
        %v1549 = vpow.pop %v1548
        %v1550 = vmul.f32 %v1531, 1.442695
        %v1551 = vpow.pop %v1550
        %v1552 = vmul.f32 %v1532, 1.442695
        %v1553 = vpow.pop %v1552
        %v1554 = vmul.f32 %v1533, 1.442695
        %v1555 = vpow.pop %v1554
        %v1556 = vmul.f32 %v1534, 1.442695
        %v1557 = vpow.pop %v1556
        %v1558 = vmul.f32 %v1535, 1.442695
        %v1559 = vpow.pop %v1558
        %v1560 = vmul.f32 %v1536, 1.442695
        %v1561 = vpow.pop %v1560
        %v1562 = vmul.f32 %v1537, 1.442695
        %v1563 = vpow.pop %v1562
        %v1564 = vmul.f32 %v1538, 1.442695
        %v1565 = vpow.pop %v1564
        %v1566 = vmul.f32 %v1539, 1.442695
        %v1567 = vpow.pop %v1566
        %v1568 = vmul.f32 %v1540, 1.442695
        %v1569 = vpow.pop %v1568
        %v1570 = vmul.f32 %v1541, 1.442695
        %v1571 = vpow.pop %v1570
        %v1572 = vmul.f32 %v1542, 1.442695
        %v1573 = vpow.pop %v1572
        %v1574 = vmul.f32 %v1543, 1.442695
        %v1575 = vpow.pop %v1574
        %v1576 = vadd.f32 %v1545, 2.0
        %v1577 = vadd.f32 %v1547, 2.0
        %v1578 = vadd.f32 %v1549, 2.0
        %v1579 = vadd.f32 %v1551, 2.0
        %v1580 = vadd.f32 %v1553, 2.0
        %v1581 = vadd.f32 %v1555, 2.0
        %v1582 = vadd.f32 %v1557, 2.0
        %v1583 = vadd.f32 %v1559, 2.0
        %v1584 = vadd.f32 %v1561, 2.0
        %v1585 = vadd.f32 %v1563, 2.0
        %v1586 = vadd.f32 %v1565, 2.0
        %v1587 = vadd.f32 %v1567, 2.0
        %v1588 = vadd.f32 %v1569, 2.0
        %v1589 = vadd.f32 %v1571, 2.0
        %v1590 = vadd.f32 %v1573, 2.0
        %v1591 = vadd.f32 %v1575, 2.0
        %v1592 = vmul.f32 %v1545, %v1576
        %v1593 = vmul.f32 %v1547, %v1577
        %v1594 = vmul.f32 %v1549, %v1578
        %v1595 = vmul.f32 %v1551, %v1579
        %v1596 = vmul.f32 %v1553, %v1580
        %v1597 = vmul.f32 %v1555, %v1581
        %v1598 = vmul.f32 %v1557, %v1582
        %v1599 = vmul.f32 %v1559, %v1583
        %v1600 = vmul.f32 %v1561, %v1584
        %v1601 = vmul.f32 %v1563, %v1585
        %v1602 = vmul.f32 %v1565, %v1586
        %v1603 = vmul.f32 %v1567, %v1587
        %v1604 = vmul.f32 %v1569, %v1588
        %v1605 = vmul.f32 %v1571, %v1589
        %v1606 = vmul.f32 %v1573, %v1590
        %v1607 = vmul.f32 %v1575, %v1591
        %v1608 = vmul.f32 %v1512, %v1592
        %v1609 = vmul.f32 %v1513, %v1593
        %v1610 = vmul.f32 %v1514, %v1594
        %v1611 = vmul.f32 %v1515, %v1595
        %v1612 = vmul.f32 %v1516, %v1596
        %v1613 = vmul.f32 %v1517, %v1597
        %v1614 = vmul.f32 %v1518, %v1598
        %v1615 = vmul.f32 %v1519, %v1599
        %v1616 = vmul.f32 %v1520, %v1600
        %v1617 = vmul.f32 %v1521, %v1601
        %v1618 = vmul.f32 %v1522, %v1602
        %v1619 = vmul.f32 %v1523, %v1603
        %v1620 = vmul.f32 %v1524, %v1604
        %v1621 = vmul.f32 %v1525, %v1605
        %v1622 = vmul.f32 %v1526, %v1606
        %v1623 = vmul.f32 %v1527, %v1607
        %v1624 = vadd.f32 %v1592, 2.0
        %v1625 = vadd.f32 %v1593, 2.0
        %v1626 = vadd.f32 %v1594, 2.0
        %v1627 = vadd.f32 %v1595, 2.0
        %v1628 = vadd.f32 %v1596, 2.0
        %v1629 = vadd.f32 %v1597, 2.0
        %v1630 = vadd.f32 %v1598, 2.0
        %v1631 = vadd.f32 %v1599, 2.0
        %v1632 = vadd.f32 %v1600, 2.0
        %v1633 = vadd.f32 %v1601, 2.0
        %v1634 = vadd.f32 %v1602, 2.0
        %v1635 = vadd.f32 %v1603, 2.0
        %v1636 = vadd.f32 %v1604, 2.0
        %v1637 = vadd.f32 %v1605, 2.0
        %v1638 = vadd.f32 %v1606, 2.0
        %v1639 = vadd.f32 %v1607, 2.0
        %v1640 = vrcp.pop %v1624
        %v1641 = vrcp.pop %v1625
        %v1642 = vrcp.pop %v1626
        %v1643 = vrcp.pop %v1627
        %v1644 = vrcp.pop %v1628
        %v1645 = vrcp.pop %v1629
        %v1646 = vrcp.pop %v1630
        %v1647 = vrcp.pop %v1631
        %v1648 = vrcp.pop %v1632
        %v1649 = vrcp.pop %v1633
        %v1650 = vrcp.pop %v1634
        %v1651 = vrcp.pop %v1635
        %v1652 = vrcp.pop %v1636
        %v1653 = vrcp.pop %v1637
        %v1654 = vrcp.pop %v1638
        %v1655 = vrcp.pop %v1639
        %v1656 = vmul.f32 %v1608, %v1640
        %v1657 = vmul.f32 %v1609, %v1641
        %v1658 = vmul.f32 %v1610, %v1642
        %v1659 = vmul.f32 %v1611, %v1643
        %v1660 = vmul.f32 %v1612, %v1644
        %v1661 = vmul.f32 %v1613, %v1645
        %v1662 = vmul.f32 %v1614, %v1646
        %v1663 = vmul.f32 %v1615, %v1647
        %v1664 = vmul.f32 %v1616, %v1648
        %v1665 = vmul.f32 %v1617, %v1649
        %v1666 = vmul.f32 %v1618, %v1650
        %v1667 = vmul.f32 %v1619, %v1651
        %v1668 = vmul.f32 %v1620, %v1652
        %v1669 = vmul.f32 %v1621, %v1653
        %v1670 = vmul.f32 %v1622, %v1654
        %v1671 = vmul.f32 %v1623, %v1655
        %s1672 = sld [smem:[#allocation2]]
        %v1673 = vstv %s1672
        %1674 = vmatprep.subr.mxu0 0.0
        %1675 = vmatpush1.xpose.msra.mxu0 %v1656
        %1676 = vmatprep.subr.mxu0 0.0
        %1677 = vmatpush1.xpose.msra.mxu0 %v1657
        %1678 = vmatprep.subr.mxu0 0.0
        %1679 = vmatpush1.xpose.msra.mxu0 %v1658
        %1680 = vmatprep.subr.mxu0 0.0
        %1681 = vmatpush1.xpose.msra.mxu0 %v1659
        %1682 = vmatprep.subr.mxu0 0.0
        %1683 = vmatpush1.xpose.msra.mxu0 %v1660
        %1684 = vmatprep.subr.mxu0 0.0
        %1685 = vmatpush1.xpose.msra.mxu0 %v1661
        %1686 = vmatprep.subr.mxu0 0.0
        %1687 = vmatpush1.xpose.msra.mxu0 %v1662
        %1688 = vmatprep.subr.mxu0 0.0
        %1689 = vmatpush1.xpose.msra.mxu0 %v1663
        %1690 = vmatprep.subr.mxu0 0.0
        %1691 = vmatpush1.xpose.msra.mxu0 %v1664
        %1692 = vmatprep.subr.mxu0 0.0
        %1693 = vmatpush1.xpose.msra.mxu0 %v1665
        %1694 = vmatprep.subr.mxu0 0.0
        %1695 = vmatpush1.xpose.msra.mxu0 %v1666
        %1696 = vmatprep.subr.mxu0 0.0
        %1697 = vmatpush1.xpose.msra.mxu0 %v1667
        %1698 = vmatprep.subr.mxu0 0.0
        %1699 = vmatpush1.xpose.msra.mxu0 %v1668
        %1700 = vmatprep.subr.mxu0 0.0
        %1701 = vmatpush1.xpose.msra.mxu0 %v1669
        %1702 = vmatprep.subr.mxu0 0.0
        %1703 = vmatpush1.xpose.msra.mxu0 %v1670
        %1704 = vmatprep.subr.mxu0 0.0
        %1705 = vmatpush1.xpose.msra.mxu0 %v1671
        %1706 = vmatprep.subr.mxu0 0.0
        %1707 = vmatpush1.xpose.msra.mxu0 0.0
        %1708 = vmatprep.subr.mxu0 0.0
        %1709 = vmatpush1.xpose.msra.mxu0 0.0
        %1710 = vmatprep.subr.mxu0 0.0
        %1711 = vmatpush1.xpose.msra.mxu0 0.0
        %1712 = vmatprep.subr.mxu0 0.0
        %1713 = vmatpush1.xpose.msra.mxu0 0.0
        %1714 = vmatprep.subr.mxu0 0.0
        %1715 = vmatpush1.xpose.msra.mxu0 0.0
        %1716 = vmatprep.subr.mxu0 0.0
        %1717 = vmatpush1.xpose.msra.mxu0 0.0
        %1718 = vmatprep.subr.mxu0 0.0
        %1719 = vmatpush1.xpose.msra.mxu0 0.0
        %1720 = vmatprep.subr.mxu0 0.0
        %1721 = vmatpush1.xpose.msra.mxu0 0.0
        %1722 = vmatprep.subr.mxu0 0.0
        %1723 = vmatpush1.xpose.msra.mxu0 0.0
        %1724 = vmatprep.subr.mxu0 0.0
        %1725 = vmatpush1.xpose.msra.mxu0 0.0
        %1726 = vmatprep.subr.mxu0 0.0
        %1727 = vmatpush1.xpose.msra.mxu0 0.0
        %1728 = vmatprep.subr.mxu0 0.0
        %1729 = vmatpush1.xpose.msra.mxu0 0.0
        %1730 = vmatprep.subr.mxu0 0.0
        %1731 = vmatpush1.xpose.msra.mxu0 0.0
        %1732 = vmatprep.subr.mxu0 0.0
        %1733 = vmatpush1.xpose.msra.mxu0 0.0
        %1734 = vmatprep.subr.mxu0 0.0
        %1735 = vmatpush1.xpose.msra.mxu0 0.0
        %1736 = vmatprep.subr.mxu0 0.0
        %1737 = vmatpush1.xpose.msra.mxu0 0.0
        %1738 = vmatprep.mubr.f32.mxu0 0.0
        %1739 = vmatmul.mubr.f32.gmra.mrb[0].mxu0 %v371
        %v1740 = vpop.f32.mrb[0].mxu0
        %v1741 = vadd.f32 %v1673, %v1740
        %v1742 = vpop.f32.mrb[0].mxu0
        %1743 = vdwg.mxu0
        %1744 = vst [vmem:[%s303] sm:$0x1] %v1741
        %s1745 = sand.u32 %s188, 1
        %s1746 = scalar_lea.sflag [#allocation5], %s1745
        %s1747 = sand.u32 %s188, 1
        %s1748 = scalar_lea.vmem [#allocation6], %s1747
        // Predicated region
        $region53: #{tpu_custom_call.1} parent=47 // pred_check
          %p1749 = pneg %p198
        $region54: #{tpu_custom_call.1} parent=47 // pred_check_branch
          %1751 = sbr.rel (%p1749) target = $region56
        $region55: #{tpu_custom_call.1} parent=47 // pred_region
          %s1753 = ssub.s32 16, 16
          %1754 = vsyncadd %s1746, %s1753
          %s1755 = smul.addr %s23, 16
          %s1756 = scalar_lea.hbm %s7, %s1755
          %s1758 = sshll.u32 %s1748, 4
          %s1759 = int_to_ptr.vmem [resolvable:$true] %s1758
          %1761 = dma.vmem_to_hbm [thread:$0]  %s1759, 16, %s1756, %s1746
        $region56: #{tpu_custom_call.1} parent=47 // pred_fallthru
          _
      $region48: #{tpu_custom_call.1} parent=5 // pred_fallthru
        _
      %p1762 = scmp.le.s32.totalorder 2, %s18
      // Predicated region
      $region57: #{tpu_custom_call.1} parent=5 // pred_check
        %p1763 = pneg %p1762
      $region58: #{tpu_custom_call.1} parent=5 // pred_check_branch
        %1765 = sbr.rel (%p1763) target = $region60
      $region59: #{tpu_custom_call.1} parent=5 // pred_region
        %s1766 = ssub.s32 %s18, 2
        // Predicated region
        $region61: #{tpu_custom_call.1} parent=59 // pred_check
          %p1767 = pneg %p204
        $region62: #{tpu_custom_call.1} parent=59 // pred_check_branch
          %1769 = sbr.rel (%p1767) target = $region64
        $region63: #{tpu_custom_call.1} parent=59 // pred_region
          %s1770 = sand.u32 %s189, 1
          %s1771 = scalar_lea.sflag [#allocation5], %s1770
          %s1772 = sand.u32 %s189, 1
          %s1773 = scalar_lea.vmem [#allocation6], %s1772
          %1774 = dma.done %s1771, 16
        $region64: #{tpu_custom_call.1} parent=59 // pred_fallthru
          _
      $region60: #{tpu_custom_call.1} parent=5 // pred_fallthru
        _
    $region6: #{tpu_custom_call.1} parent=1 // loop_footer
      %s22 = sadd.s32 1, %s18
    $region7: #{tpu_custom_call.1} parent=1 // loop_footer_branch
      %17 = sbr.rel target = $region3
    $region8: #{tpu_custom_call.1} parent=1 // loop_exit
      _
    %1775 = vsyncpa [#allocation4], 1
    %s1776 = scalar_lea.sflag [#allocation4], 1
    %1777 = vsyncpa %s1776, 1
    %1778 = vsyncpa [#allocation5], 1
    %s1779 = scalar_lea.sflag [#allocation5], 1
    %1780 = vsyncpa %s1779, 1

</llo_original>
